<compile_context>
chip_gen: v7x
topology: tpu7x:2x2x1
jax: 0.10.0
libtpu: 0.0.40
codegen_flags: <defaults>
</compile_context>

<pallas_src>
import jax
import jax.numpy as jnp
import numpy as np
from jax.experimental import pallas as pl
from jax.experimental.pallas import tpu as pltpu


class VIEWS:
    LCC = "L-CC"
    RCC = "R-CC"
    LMLO = "L-MLO"
    RMLO = "R-MLO"
    LIST = [LCC, RCC, LMLO, RMLO]


FEAT = 256                 # backbone feature width / fc width (Linear(256, 256))
OUT_ROWS, OUT_COLS = 4, 2  # OutputLayer(256, (4, 2))
OUT_FLAT = OUT_ROWS * OUT_COLS
KSIZE = 3                  # stand-in backbone conv kernel size
MAX_ROW_TILE = 2048        # max patch rows per grid step
LANE = 128


# FourViewModel weight sharing: LMLO/RMLO use the "cc" backbone, LCC/RCC "mlo".
_BACKBONE = {VIEWS.LMLO: "conv_cc", VIEWS.RMLO: "conv_cc",
             VIEWS.LCC: "conv_mlo", VIEWS.RCC: "conv_mlo"}
# ImageBreastModel.forward applies output_layer_lcc to the LMLO branch, etc.
_OUTPUT = {VIEWS.LMLO: "out_lcc", VIEWS.RMLO: "out_rcc",
           VIEWS.LCC: "out_lmlo", VIEWS.RCC: "out_rmlo"}


# ----------------------------------------------------------------------------
# Fused Pallas kernel: conv + ReLU -> avg-pool accumulate -> fc1 + ReLU ->
#                      OutputLayer -> pairwise log_softmax.
# Grid = (view, image, row-tile); the row-tile axis is the reduction axis.
# ----------------------------------------------------------------------------
def _make_fused_kernel(inv_p):
    def kernel(patches_ref, wc_ref, bc_ref, w1_ref, b1_ref, w2_ref, b2_ref,
               out_ref, pooled_acc):
        n = pl.program_id(1)           # image index within the batch
        t = pl.program_id(2)           # row-tile index within the image

        @pl.when(t == 0)
        def _():
            pooled_acc[...] = jnp.zeros_like(pooled_acc)

        # Backbone conv over this tile of im2col patches (bf16 x bf16 -> f32).
        feat = jnp.dot(patches_ref[...], wc_ref[...],
                       preferred_element_type=jnp.float32) + bc_ref[...]
        feat = jnp.maximum(feat, 0.0)
        # Global average pool: accumulate the column sum (XLU reduce, no matmul).
        pooled_acc[...] += jnp.sum(feat, axis=0, keepdims=True)

        @pl.when(t == pl.num_programs(2) - 1)
        def _():
            pooled = pooled_acc[...] * inv_p                       # [1, 256]
            # fc1 + ReLU
            h1 = jnp.dot(pooled, w1_ref[...],
                         preferred_element_type=jnp.float32) + b1_ref[...]
            h1 = jnp.maximum(h1, 0.0)
            # OutputLayer as a single matmul; columns are [class0 x4 | class1 x4].
            logits = jnp.dot(h1, w2_ref[...],
                             preferred_element_type=jnp.float32) + b2_ref[...]
            l0 = logits[:, :OUT_ROWS]
            l1 = logits[:, OUT_ROWS:]
            m = jnp.maximum(l0, l1)
            lse = m + jnp.log(jnp.exp(l0 - m) + jnp.exp(l1 - m))
            res = jnp.concatenate([l0 - lse, l1 - lse], axis=-1)   # [1, 8]
            # Write this image's row of the resident (N, 8) output block.
            row_ids = jax.lax.broadcasted_iota(jnp.int32, (out_ref.shape[0], 1), 0)
            out_ref[...] = jnp.where(row_ids == n, res, out_ref[...])

    return kernel


def _pick_row_tile(p):
    """Largest row tile <= MAX_ROW_TILE that evenly divides P (spatial size)."""
    if p <= MAX_ROW_TILE:
        return p
    best = 1
    for cand in range(8, MAX_ROW_TILE + 1, 8):
        if p % cand == 0:
            best = cand
    return best if best > 1 else p


def _fused_views_forward(patches, conv_w, conv_b, fc1_w, fc1_b, out_w, out_b):
    """patches: [V, N, P, Kpad] bf16; weights stacked per view. Returns [V, N, 8]."""
    V, N, P, KP = patches.shape
    row_tile = _pick_row_tile(P)
    assert P % row_tile == 0
    T = P // row_tile
    inv_p = 1.0 / float(P)

    kernel = _make_fused_kernel(inv_p)

    return pl.pallas_call(
        kernel,
        out_shape=jax.ShapeDtypeStruct((V, N, OUT_FLAT), jnp.float32),
        grid_spec=pltpu.PrefetchScalarGridSpec(
            num_scalar_prefetch=0,
            grid=(V, N, T),
            in_specs=[
                # im2col patch tile for (view, image, tile)
                pl.BlockSpec((None, None, row_tile, KP),
                             lambda v, n, t: (v, n, t, 0)),
                # per-view weights (resident across the n / t axes)
                pl.BlockSpec((None, KP, FEAT), lambda v, n, t: (v, 0, 0)),
                pl.BlockSpec((None, 1, FEAT), lambda v, n, t: (v, 0, 0)),
                pl.BlockSpec((None, FEAT, FEAT), lambda v, n, t: (v, 0, 0)),
                pl.BlockSpec((None, 1, FEAT), lambda v, n, t: (v, 0, 0)),
                pl.BlockSpec((None, FEAT, OUT_FLAT), lambda v, n, t: (v, 0, 0)),
                pl.BlockSpec((None, 1, OUT_FLAT), lambda v, n, t: (v, 0, 0)),
            ],
            out_specs=pl.BlockSpec((None, N, OUT_FLAT), lambda v, n, t: (v, 0, 0)),
            scratch_shapes=[pltpu.VMEM((1, FEAT), jnp.float32)],
        ),
        compiler_params=pltpu.CompilerParams(
            dimension_semantics=("parallel", "arbitrary", "arbitrary")),
    )(patches, conv_w, conv_b, fc1_w, fc1_b, out_w, out_b)


# ----------------------------------------------------------------------------
# JAX glue: layout conversion, parameter stacking, noise, dispatch.
# ----------------------------------------------------------------------------
def _round_up(x, m):
    return ((x + m - 1) // m) * m


def _patches_nchw(x, k=KSIZE):
    """x: [N, C, H, W] -> patches [N, H*W, C*k*k] (SAME padding, stride 1)."""
    N, C, H, W = x.shape
    pad = k // 2
    xp = jnp.pad(x, ((0, 0), (0, 0), (pad, pad), (pad, pad)))
    cols = [xp[:, :, dy:dy + H, dx:dx + W] for dy in range(k) for dx in range(k)]
    p = jnp.stack(cols, axis=2)                 # [N, C, k*k, H, W]
    p = jnp.transpose(p, (0, 3, 4, 1, 2))       # [N, H, W, C, k*k]
    return p.reshape(N, H * W, C * k * k)


def _linear_params(key, fan_in, fan_out):
    kw, kb = jax.random.split(key)
    bound = 1.0 / np.sqrt(fan_in)
    w = jax.random.uniform(kw, (fan_in, fan_out), jnp.float32, -bound, bound)
    b = jax.random.uniform(kb, (fan_out,), jnp.float32, -bound, bound)
    return w, b


def init_params(key, input_channels):
    keys = jax.random.split(key, 10)
    K = input_channels * KSIZE * KSIZE
    params = {}
    params["conv_cc"] = _linear_params(keys[0], K, FEAT)
    params["conv_mlo"] = _linear_params(keys[1], K, FEAT)
    for i, v in enumerate(VIEWS.LIST):
        params[f"fc1_{v}"] = _linear_params(keys[2 + i], FEAT, FEAT)
    for i, name in enumerate(["lcc", "rcc", "lmlo", "rmlo"]):
        params[f"out_{name}"] = _linear_params(keys[6 + i], FEAT, OUT_FLAT)
    return params


def _stack_view_params(params):
    """Stack per-view weights (leading view axis), pad K->128, cast conv to bf16,
    and permute OutputLayer columns to the grouped [class0 | class1] layout."""
    conv_w, conv_b, fc1_w, fc1_b, out_w, out_b = [], [], [], [], [], []
    for view in VIEWS.LIST:
        cw, cb = params[_BACKBONE[view]]
        fw, fb = params[f"fc1_{view}"]
        ow, ob = params[_OUTPUT[view]]
        K = cw.shape[0]
        kpad = _round_up(K, LANE)
        conv_w.append(jnp.pad(cw, ((0, kpad - K), (0, 0))).astype(jnp.bfloat16))
        conv_b.append(cb[None, :])
        fc1_w.append(fw)
        fc1_b.append(fb[None, :])
        # (4, 2) reshape: flat index 2*r + c  ->  group columns by class c.
        out_w.append(jnp.concatenate([ow[:, 0::2], ow[:, 1::2]], axis=1))
        out_b.append(jnp.concatenate([ob[0::2], ob[1::2]])[None, :])
    return tuple(jnp.stack(a) for a in (conv_w, conv_b, fc1_w, fc1_b, out_w, out_b))


def _add_gaussian_noise(input_image, noise_key, std=0.01):
    # AllViewsGaussianNoise(0.01), training-mode behaviour (identity in eval).
    keys = jax.random.split(noise_key, len(VIEWS.LIST))
    return {v: input_image[v] + std * jax.random.normal(k, input_image[v].shape,
                                                        input_image[v].dtype)
            for v, k in zip(VIEWS.LIST, keys)}


def image_breast_model_forward(params, input_image, noise_key):
    """input_image: dict view -> [N, C, H, W] (NCHW, as in PyTorch).
    All views are assumed to share the same shape (needed to fuse into one call)."""
    noisy = _add_gaussian_noise(input_image, noise_key)
    N, C, H, W = next(iter(noisy.values())).shape
    P = H * W
    K = C * KSIZE * KSIZE
    kpad = _round_up(K, LANE)

    stacks = _stack_view_params(params)
    patches = jnp.stack([
        jnp.pad(_patches_nchw(noisy[v]),
                ((0, 0), (0, 0), (0, kpad - K))).astype(jnp.bfloat16)
        for v in VIEWS.LIST])                                    # [4, N, P, kpad]

    out8 = _fused_views_forward(patches, *stacks)                # [4, N, 8]

    out = {}
    for vi, view in enumerate(VIEWS.LIST):
        # grouped [class0 x4 | class1 x4]  ->  (N, 4, 2)
        out[view] = jnp.transpose(out8[vi].reshape(N, OUT_COLS, OUT_ROWS), (0, 2, 1))
    return out


def reference_forward(params, input_image, noise_key):
    """Pure-JAX reference of the same math (conv operands bf16-quantized to
    match the kernel; everything else f32)."""
    noisy = _add_gaussian_noise(input_image, noise_key)
    N, _, H, W = next(iter(noisy.values())).shape
    P = H * W
    out = {}
    for view in VIEWS.LIST:
        cw, cb = params[_BACKBONE[view]]
        fw, fb = params[f"fc1_{view}"]
        ow, ob = params[_OUTPUT[view]]
        patches = _patches_nchw(noisy[view]).reshape(N * P, -1)
        pq = patches.astype(jnp.bfloat16).astype(jnp.float32)
        cwq = cw.astype(jnp.bfloat16).astype(jnp.float32)
        feat = jax.nn.relu(pq @ cwq + cb)                        # [N*P, 256]
        pooled = feat.reshape(N, P, FEAT).mean(axis=1)           # AllViewsAvgPool
        h1 = jax.nn.relu(pooled @ fw + fb)                       # fc1 + ReLU
        logits = (h1 @ ow + ob).reshape(N, OUT_ROWS, OUT_COLS)   # OutputLayer
        out[view] = jax.nn.log_softmax(logits, axis=-1)
    return out


if __name__ == "__main__":
    N, C, H, W = 2, 4, 16, 16
    key = jax.random.PRNGKey(0)
    pkey, dkey, nkey = jax.random.split(key, 3)

    params = init_params(pkey, C)
    dkeys = jax.random.split(dkey, len(VIEWS.LIST))
    input_image = {v: jax.random.normal(k, (N, C, H, W), jnp.float32)
                   for v, k in zip(VIEWS.LIST, dkeys)}

    out = jax.block_until_ready(image_breast_model_forward(params, input_image, nkey))
    ref = jax.block_until_ready(reference_forward(params, input_image, nkey))

    for v in VIEWS.LIST:
        assert out[v].shape == (N, OUT_ROWS, OUT_COLS), out[v].shape
        np.testing.assert_allclose(np.asarray(out[v]), np.asarray(ref[v]),
                                   atol=1e-3, rtol=1e-3)
    print("KERNEL_OK")
</pallas_src>

<mosaic_0001>
module attributes {stable_mosaic.version = 11 : i64} {
  func.func @kernel(%arg0: i32, %arg1: i32, %arg2: i32, %arg3: memref<1x1x256x128xbf16, #tpu.memory_space<vmem>>, %arg4: memref<1x128x256xbf16, #tpu.memory_space<vmem>>, %arg5: memref<1x1x256xf32, #tpu.memory_space<vmem>>, %arg6: memref<1x256x256xf32, #tpu.memory_space<vmem>>, %arg7: memref<1x1x256xf32, #tpu.memory_space<vmem>>, %arg8: memref<1x256x8xf32, #tpu.memory_space<vmem>>, %arg9: memref<1x1x8xf32, #tpu.memory_space<vmem>>, %arg10: memref<1x2x8xf32, #tpu.memory_space<vmem>>, %arg11: memref<1x256xf32, #tpu.memory_space<vmem>>) attributes {dimension_semantics = [#tpu.dimension_semantics<parallel>, #tpu.dimension_semantics<arbitrary>, #tpu.dimension_semantics<arbitrary>], iteration_bounds = array<i64: 4, 2, 1>, scalar_prefetch = 0 : i64, scratch_operands = 1 : i64, tpu.core_type = #tpu.core_type<tc>, window_params = [{transform_indices = @transform_0, window_bounds = array<i64: 1, 1, 256, 128>}, {transform_indices = @transform_1, window_bounds = array<i64: 1, 128, 256>}, {transform_indices = @transform_2, window_bounds = array<i64: 1, 1, 256>}, {transform_indices = @transform_3, window_bounds = array<i64: 1, 256, 256>}, {transform_indices = @transform_4, window_bounds = array<i64: 1, 1, 256>}, {transform_indices = @transform_5, window_bounds = array<i64: 1, 256, 8>}, {transform_indices = @transform_6, window_bounds = array<i64: 1, 1, 8>}, {transform_indices = @transform_7, window_bounds = array<i64: 1, 2, 8>}]} {
    %c0_i32 = arith.constant 0 : i32
    %0 = arith.cmpi eq, %arg2, %c0_i32 : i32
    %1 = arith.extui %0 : i1 to i32
    %c0_i32_0 = arith.constant 0 : i32
    %2 = arith.cmpi ne, %1, %c0_i32_0 : i32
    scf.if %2 {
      %cst_18 = arith.constant 0.000000e+00 : f32
      %22 = vector.broadcast %cst_18 : f32 to vector<1x256xf32>
      %c0_19 = arith.constant 0 : index
      %c0_20 = arith.constant 0 : index
      %23 = vector.load %arg11[%c0_19, %c0_20] : memref<1x256xf32, #tpu.memory_space<vmem>>, vector<1x256xf32>
      tpu.vector_store %arg11[%c0_19, %c0_20], %22 {strides = array<i32>} : memref<1x256xf32, #tpu.memory_space<vmem>>, vector<1x256xf32>,
    } else {
    }
    %c0 = arith.constant 0 : index
    %c0_1 = arith.constant 0 : index
    %c0_2 = arith.constant 0 : index
    %c0_3 = arith.constant 0 : index
    %3 = vector.load %arg3[%c0, %c0_1, %c0_2, %c0_3] : memref<1x1x256x128xbf16, #tpu.memory_space<vmem>>, vector<1x1x256x128xbf16>
    %4 = vector.shape_cast %3 : vector<1x1x256x128xbf16> to vector<256x128xbf16>
    %c0_4 = arith.constant 0 : index
    %c0_5 = arith.constant 0 : index
    %c0_6 = arith.constant 0 : index
    %5 = vector.load %arg4[%c0_4, %c0_5, %c0_6] : memref<1x128x256xbf16, #tpu.memory_space<vmem>>, vector<1x128x256xbf16>
    %6 = vector.shape_cast %5 : vector<1x128x256xbf16> to vector<128x256xbf16>
    %cst = arith.constant dense<0.000000e+00> : vector<256x256xf32>
    %7 = tpu.matmul %4, %6, %cst {dimension_numbers = #tpu.dot_dimension_numbers<[1], [0], [0], [1], [0, 0, 1, 1], [], []>} : vector<256x128xbf16>, vector<128x256xbf16>, vector<256x256xf32> -> vector<256x256xf32>
    %c0_7 = arith.constant 0 : index
    %c0_8 = arith.constant 0 : index
    %c0_9 = arith.constant 0 : index
    %8 = vector.load %arg5[%c0_7, %c0_8, %c0_9] : memref<1x1x256xf32, #tpu.memory_space<vmem>>, vector<1x1x256xf32>
    %9 = vector.shape_cast %8 : vector<1x1x256xf32> to vector<1x256xf32>
    %10 = vector.broadcast %9 : vector<1x256xf32> to vector<256x256xf32>
    %11 = arith.addf %7, %10 : vector<256x256xf32>
    %cst_10 = arith.constant 0.000000e+00 : f32
    %12 = vector.broadcast %cst_10 : f32 to vector<256x256xf32>
    %13 = arith.maximumf %11, %12 : vector<256x256xf32>
    %c0_11 = arith.constant 0 : index
    %c0_12 = arith.constant 0 : index
    %14 = vector.load %arg11[%c0_11, %c0_12] : memref<1x256xf32, #tpu.memory_space<vmem>>, vector<1x256xf32>
    %cst_13 = arith.constant dense<0.000000e+00> : vector<256xf32>
    %15 = vector.multi_reduction <add>, %13, %cst_13 [0] : vector<256x256xf32> to vector<256xf32>
    %16 = vector.shape_cast %15 : vector<256xf32> to vector<1x256xf32>
    %17 = arith.addf %14, %16 : vector<1x256xf32>
    %c0_14 = arith.constant 0 : index
    %c0_15 = arith.constant 0 : index
    %18 = vector.load %arg11[%c0_14, %c0_15] : memref<1x256xf32, #tpu.memory_space<vmem>>, vector<1x256xf32>
    tpu.vector_store %arg11[%c0_14, %c0_15], %17 {strides = array<i32>} : memref<1x256xf32, #tpu.memory_space<vmem>>, vector<1x256xf32>,
    %c0_i32_16 = arith.constant 0 : i32
    %19 = arith.cmpi eq, %arg2, %c0_i32_16 : i32
    %20 = arith.extui %19 : i1 to i32
    %c0_i32_17 = arith.constant 0 : i32
    %21 = arith.cmpi ne, %20, %c0_i32_17 : i32
    scf.if %21 {
      %c0_18 = arith.constant 0 : index
      %c0_19 = arith.constant 0 : index
      %22 = vector.load %arg11[%c0_18, %c0_19] : memref<1x256xf32, #tpu.memory_space<vmem>>, vector<1x256xf32>
      %cst_20 = arith.constant 3.906250e-03 : f32
      %23 = vector.broadcast %cst_20 : f32 to vector<1x256xf32>
      %24 = arith.mulf %22, %23 : vector<1x256xf32>
      %c0_21 = arith.constant 0 : index
      %c0_22 = arith.constant 0 : index
      %c0_23 = arith.constant 0 : index
      %25 = vector.load %arg6[%c0_21, %c0_22, %c0_23] : memref<1x256x256xf32, #tpu.memory_space<vmem>>, vector<1x256x256xf32>
      %26 = vector.shape_cast %25 : vector<1x256x256xf32> to vector<256x256xf32>
      %cst_24 = arith.constant dense<0.000000e+00> : vector<1x256xf32>
      %27 = tpu.matmul %24, %26, %cst_24 {dimension_numbers = #tpu.dot_dimension_numbers<[1], [0], [0], [1], [0, 0, 1, 1], [], []>} : vector<1x256xf32>, vector<256x256xf32>, vector<1x256xf32> -> vector<1x256xf32>
      %c0_25 = arith.constant 0 : index
      %c0_26 = arith.constant 0 : index
      %c0_27 = arith.constant 0 : index
      %28 = vector.load %arg7[%c0_25, %c0_26, %c0_27] : memref<1x1x256xf32, #tpu.memory_space<vmem>>, vector<1x1x256xf32>
      %29 = vector.shape_cast %28 : vector<1x1x256xf32> to vector<1x256xf32>
      %30 = arith.addf %27, %29 : vector<1x256xf32>
      %cst_28 = arith.constant 0.000000e+00 : f32
      %31 = vector.broadcast %cst_28 : f32 to vector<1x256xf32>
      %32 = arith.maximumf %30, %31 : vector<1x256xf32>
      %c0_29 = arith.constant 0 : index
      %c0_30 = arith.constant 0 : index
      %c0_31 = arith.constant 0 : index
      %33 = vector.load %arg8[%c0_29, %c0_30, %c0_31] : memref<1x256x8xf32, #tpu.memory_space<vmem>>, vector<1x256x8xf32>
      %34 = vector.shape_cast %33 : vector<1x256x8xf32> to vector<256x8xf32>
      %cst_32 = arith.constant dense<0.000000e+00> : vector<1x8xf32>
      %35 = tpu.matmul %32, %34, %cst_32 {dimension_numbers = #tpu.dot_dimension_numbers<[1], [0], [0], [1], [0, 0, 1, 1], [], []>} : vector<1x256xf32>, vector<256x8xf32>, vector<1x8xf32> -> vector<1x8xf32>
      %c0_33 = arith.constant 0 : index
      %c0_34 = arith.constant 0 : index
      %c0_35 = arith.constant 0 : index
      %36 = vector.load %arg9[%c0_33, %c0_34, %c0_35] : memref<1x1x8xf32, #tpu.memory_space<vmem>>, vector<1x1x8xf32>
      %37 = vector.shape_cast %36 : vector<1x1x8xf32> to vector<1x8xf32>
      %38 = arith.addf %35, %37 : vector<1x8xf32>
      %39 = vector.extract_strided_slice %38 {offsets = [0, 0], sizes = [1, 4], strides = [1, 1]} : vector<1x8xf32> to vector<1x4xf32>
      %40 = vector.extract_strided_slice %38 {offsets = [0, 4], sizes = [1, 4], strides = [1, 1]} : vector<1x8xf32> to vector<1x4xf32>
      %41 = arith.maximumf %39, %40 : vector<1x4xf32>
      %42 = arith.subf %39, %41 : vector<1x4xf32>
      %43 = math.exp %42 : vector<1x4xf32>
      %44 = arith.subf %40, %41 : vector<1x4xf32>
      %45 = math.exp %44 : vector<1x4xf32>
      %46 = arith.addf %43, %45 : vector<1x4xf32>
      %47 = math.log %46 : vector<1x4xf32>
      %48 = arith.addf %41, %47 : vector<1x4xf32>
      %49 = arith.subf %39, %48 : vector<1x4xf32>
      %50 = arith.subf %40, %48 : vector<1x4xf32>
      %51 = tpu.concatenate %49, %50 in 1 : vector<1x4xf32>, vector<1x4xf32> -> vector<1x8xf32>
      %52 = tpu.iota {dimensions = array<i32: 0>} : vector<2x1xi32>
      %53 = vector.broadcast %arg1 : i32 to vector<2x1xi32>
      %54 = arith.cmpi eq, %52, %53 : vector<2x1xi32>
      %c0_36 = arith.constant 0 : index
      %c0_37 = arith.constant 0 : index
      %c0_38 = arith.constant 0 : index
      %55 = vector.load %arg10[%c0_36, %c0_37, %c0_38] : memref<1x2x8xf32, #tpu.memory_space<vmem>>, vector<1x2x8xf32>
      %56 = vector.shape_cast %55 : vector<1x2x8xf32> to vector<2x8xf32>
      %57 = vector.shape_cast %54 : vector<2x1xi1> to vector<2x1xi1>
      %58 = vector.broadcast %57 : vector<2x1xi1> to vector<2x8xi1>
      %59 = vector.shape_cast %51 : vector<1x8xf32> to vector<1x8xf32>
      %60 = vector.broadcast %59 : vector<1x8xf32> to vector<2x8xf32>
      %61 = arith.select %58, %60, %56 : vector<2x8xi1>, vector<2x8xf32>
      %c0_39 = arith.constant 0 : index
      %c0_40 = arith.constant 0 : index
      %c0_41 = arith.constant 0 : index
      %62 = vector.load %arg10[%c0_39, %c0_40, %c0_41] : memref<1x2x8xf32, #tpu.memory_space<vmem>>, vector<1x2x8xf32>
      %63 = vector.shape_cast %62 : vector<1x2x8xf32> to vector<2x8xf32>
      %64 = vector.shape_cast %61 : vector<2x8xf32> to vector<1x2x8xf32>
      tpu.vector_store %arg10[%c0_39, %c0_40, %c0_41], %64 {strides = array<i32>} : memref<1x2x8xf32, #tpu.memory_space<vmem>>, vector<1x2x8xf32>,
    } else {
    }
    return
  }
  func.func @transform_0(%arg0: i32, %arg1: i32, %arg2: i32) -> (i32, i32, i32, i32) {
    %c0_i32 = arith.constant 0 : i32
    %c0_i32_0 = arith.constant 0 : i32
    return %arg0, %arg1, %arg2, %c0_i32 : i32, i32, i32, i32
  }
  func.func @transform_1(%arg0: i32, %arg1: i32, %arg2: i32) -> (i32, i32, i32) {
    %c0_i32 = arith.constant 0 : i32
    %c0_i32_0 = arith.constant 0 : i32
    %c0_i32_1 = arith.constant 0 : i32
    return %arg0, %c0_i32, %c0_i32_0 : i32, i32, i32
  }
  func.func @transform_2(%arg0: i32, %arg1: i32, %arg2: i32) -> (i32, i32, i32) {
    %c0_i32 = arith.constant 0 : i32
    %c0_i32_0 = arith.constant 0 : i32
    %c0_i32_1 = arith.constant 0 : i32
    return %arg0, %c0_i32, %c0_i32_0 : i32, i32, i32
  }
  func.func @transform_3(%arg0: i32, %arg1: i32, %arg2: i32) -> (i32, i32, i32) {
    %c0_i32 = arith.constant 0 : i32
    %c0_i32_0 = arith.constant 0 : i32
    %c0_i32_1 = arith.constant 0 : i32
    return %arg0, %c0_i32, %c0_i32_0 : i32, i32, i32
  }
  func.func @transform_4(%arg0: i32, %arg1: i32, %arg2: i32) -> (i32, i32, i32) {
    %c0_i32 = arith.constant 0 : i32
    %c0_i32_0 = arith.constant 0 : i32
    %c0_i32_1 = arith.constant 0 : i32
    return %arg0, %c0_i32, %c0_i32_0 : i32, i32, i32
  }
  func.func @transform_5(%arg0: i32, %arg1: i32, %arg2: i32) -> (i32, i32, i32) {
    %c0_i32 = arith.constant 0 : i32
    %c0_i32_0 = arith.constant 0 : i32
    %c0_i32_1 = arith.constant 0 : i32
    return %arg0, %c0_i32, %c0_i32_0 : i32, i32, i32
  }
  func.func @transform_6(%arg0: i32, %arg1: i32, %arg2: i32) -> (i32, i32, i32) {
    %c0_i32 = arith.constant 0 : i32
    %c0_i32_0 = arith.constant 0 : i32
    %c0_i32_1 = arith.constant 0 : i32
    return %arg0, %c0_i32, %c0_i32_0 : i32, i32, i32
  }
  func.func @transform_7(%arg0: i32, %arg1: i32, %arg2: i32) -> (i32, i32, i32) {
    %c0_i32 = arith.constant 0 : i32
    %c0_i32_0 = arith.constant 0 : i32
    %c0_i32_1 = arith.constant 0 : i32
    return %arg0, %c0_i32, %c0_i32_0 : i32, i32, i32
  }
}

</mosaic_0001>

<llo_original>
// kernel: tpu_custom_call.1
$region0: #{tpu_custom_call.1}
  #allocation0 [shape = 'u32[]', space=smem, size = 0x4, offset = 0x4, fixed_abs, tag = 'smem constant byte address 0x4 - core index']
  #allocation1 [shape = 'u32[144,128]{1,0:T(1,128)}', space=vmem, size = 0x12000, scoped, tag = 'internal scratch']
  #allocation2 [shape = 'f32[1,256]{1,0:T(1,128)}', space=vmem, size = 0x400, scoped, tag = 'scratch operand']
  %s0 = inlined_call_operand.vmem [shape: bf16[4,2,256,128], index: 0, kind: input, shape index: {}]
  %s1 = inlined_call_operand.hbm [shape: bf16[4,128,256], index: 1, kind: input, shape index: {}]
  %s2 = inlined_call_operand.vmem [shape: f32[4,1,256], index: 2, kind: input, shape index: {}]
  %s3 = inlined_call_operand.hbm [shape: f32[4,256,256], index: 3, kind: input, shape index: {}]
  %s4 = inlined_call_operand.vmem [shape: f32[4,1,256], index: 4, kind: input, shape index: {}]
  %s5 = inlined_call_operand.vmem [shape: f32[4,256,8], index: 5, kind: input, shape index: {}]
  %s6 = inlined_call_operand.vmem [shape: f32[4,1,8], index: 6, kind: input, shape index: {}]
  %s7 = inlined_call_operand.hbm [shape: f32[4,2,8], index: 7, kind: output, shape index: {}]
  %s8 = sld [smem:[#allocation0]]
  $region77: #{tpu_custom_call.1} parent=0
    _
  %s10 = ssub.s32 1, %s8
  %s11 = scalar_select 0, %s10, %s8
  $region1: #{tpu_custom_call.1} parent=0
    #allocation3 [shape = 'u8[131072]{0}', space=vmem, size = 0x20000, scoped, tag = 'input window, operand 1']
    #allocation4 [shape = 's32[2]{0}', space=sflag, size = 0x8, scoped, tag = 'scoped memory for tpu_custom_call.1']
    #allocation5 [shape = 's32[2]{0}', space=sflag, size = 0x8, scoped, tag = 'scoped memory for tpu_custom_call.1']
    #allocation6 [shape = 'u8[524288]{0}', space=vmem, size = 0x80000, scoped, tag = 'input window, operand 3']
    #allocation7 [shape = 's32[2]{0}', space=sflag, size = 0x8, scoped, tag = 'scoped memory for tpu_custom_call.1']
    #allocation8 [shape = 'u8[2048]{0}', space=vmem, size = 0x800, scoped, tag = 'output window, operand 0']
    %12 = vsyncpa [#allocation4], 0
    %s13 = scalar_lea.sflag [#allocation4], 1
    %14 = vsyncpa %s13, 0
    %15 = vsyncpa [#allocation7], 0
    %s16 = scalar_lea.sflag [#allocation7], 1
    %17 = vsyncpa %s16, 0
    %18 = vsyncpa [#allocation5], 0
    %s19 = scalar_lea.sflag [#allocation5], 1
    %20 = vsyncpa %s19, 0
    loop: start=0, step=1, limit=10
    $region2: #{tpu_custom_call.1} parent=1 // loop_pre_header
      _
    $region3: #{tpu_custom_call.1} parent=1 // loop_header
      %s22 = sphi 0, %s26
      %p23 = scmp.ge.s32.totalorder %s22, 10
      %s29 = sphi 0, %s48
      %s30 = sphi 0, %s44
      %s31 = sphi 0, %s40
      %s32 = sphi 0, %s29
      %s33 = sphi 0, %s30
      %s34 = sphi 0, %s31
      %s35 = sphi 0, %s32
      %s36 = sphi 0, %s33
      %s37 = sphi 0, %s34
      %s55 = sphi 0, %s57
      %s58 = sphi 0, %s55
      %s59 = sphi 0, %s58
      %s75 = sphi 0, %s59
      %s81 = sphi 0, %s83
      %s84 = sphi 0, %s81
      %s85 = sphi 0, %s84
      %s101 = sphi 0, %s85
      %s107 = sphi 0, %s109
      %s110 = sphi 0, %s107
      %s111 = sphi 0, %s110
      %s127 = sphi 0, %s111
      %s133 = sphi 0, %s135
      %s136 = sphi 0, %s133
      %s137 = sphi 0, %s136
      %s153 = sphi 0, %s137
      %s159 = sphi 0, %s161
      %s162 = sphi 0, %s159
      %s163 = sphi 0, %s162
      %s179 = sphi 0, %s163
      %s185 = sphi 0, %s187
      %s188 = sphi 0, %s185
      %s189 = sphi 0, %s188
      %s205 = sphi 0, %s189
      %s211 = sphi 0, %s213
      %s214 = sphi 0, %s211
      %s215 = sphi 0, %s214
      %s231 = sphi 0, %s215
      %s237 = sphi 0, %s239
      %s240 = sphi 0, %s237
      %s241 = sphi 0, %s240
      %s257 = sphi 0, %s241
    $region4: #{tpu_custom_call.1} parent=1 // loop_header_branch
      %25 = sbr.rel (%p23) target = $region8
    $region5: #{tpu_custom_call.1} parent=1 // loop_body
      %s27 = ssub.s32 %s22, 1
      %s28 = ssub.s32 %s22, 2
      %s38 = sadd.s32 1, %s31
      %p39 = scmp.ge.s32.totalorder %s38, 1
      %s40 = scalar_select %p39, 0, %s38
      %s41 = sadd.s32 1, %s30
      %s42 = scalar_select %p39, %s41, %s30
      %p43 = scmp.ge.s32.totalorder %s42, 2
      %s44 = scalar_select %p43, 0, %s42
      %s45 = sadd.s32 1, %s29
      %s46 = scalar_select %p43, %s45, %s29
      %p47 = scmp.ge.s32.totalorder %s46, 4
      %s48 = scalar_select %p47, 0, %s46
      %s49 = ssub.s32 %s29, %s48
      %s50 = ssub.s32 %s30, %s44
      %s51 = sor.u32 %s49, %s50
      %s52 = ssub.s32 %s31, %s40
      %s53 = sor.u32 %s51, %s52
      %p54 = scmp.eq.s32.totalorder %s53, 0
      %s56 = sadd.s32 %s55, 1
      %s57 = scalar_select %p54, %s55, %s56
      %p60 = pneg %p54
      %p61 = scmp.eq.s32.totalorder %s22, 7
      %p62 = por %p60, %p61
      %p63 = scmp.ne.s32.totalorder %s55, %s58
      %p64 = scmp.eq.s32.totalorder %s22, 0
      %p65 = por %p63, %p64
      %p66 = scmp.ne.s32.totalorder %s55, %s58
      %p67 = scmp.eq.s32.totalorder %s27, 7
      %p68 = por %p66, %p67
      %p69 = scmp.ne.s32.totalorder %s58, %s59
      %p70 = scmp.eq.s32.totalorder %s27, 0
      %p71 = por %p69, %p70
      %p72 = scmp.ne.s32.totalorder %s58, %s59
      %p73 = scmp.eq.s32.totalorder %s28, 7
      %p74 = por %p72, %p73
      %p76 = scmp.ne.s32.totalorder %s59, %s75
      %p77 = scmp.eq.s32.totalorder %s28, 0
      %p78 = por %p76, %p77
      %s79 = ssub.s32 %s29, %s48
      %p80 = scmp.eq.s32.totalorder %s79, 0
      %s82 = sadd.s32 %s81, 1
      %s83 = scalar_select %p80, %s81, %s82
      %p86 = pneg %p80
      %p87 = scmp.eq.s32.totalorder %s22, 7
      %p88 = por %p86, %p87
      %p89 = scmp.ne.s32.totalorder %s81, %s84
      %p90 = scmp.eq.s32.totalorder %s22, 0
      %p91 = por %p89, %p90
      %p92 = scmp.ne.s32.totalorder %s81, %s84
      %p93 = scmp.eq.s32.totalorder %s27, 7
      %p94 = por %p92, %p93
      %p95 = scmp.ne.s32.totalorder %s84, %s85
      %p96 = scmp.eq.s32.totalorder %s27, 0
      %p97 = por %p95, %p96
      %p98 = scmp.ne.s32.totalorder %s84, %s85
      %p99 = scmp.eq.s32.totalorder %s28, 7
      %p100 = por %p98, %p99
      %p102 = scmp.ne.s32.totalorder %s85, %s101
      %p103 = scmp.eq.s32.totalorder %s28, 0
      %p104 = por %p102, %p103
      %s105 = ssub.s32 %s29, %s48
      %p106 = scmp.eq.s32.totalorder %s105, 0
      %s108 = sadd.s32 %s107, 1
      %s109 = scalar_select %p106, %s107, %s108
      %p112 = pneg %p106
      %p113 = scmp.eq.s32.totalorder %s22, 7
      %p114 = por %p112, %p113
      %p115 = scmp.ne.s32.totalorder %s107, %s110
      %p116 = scmp.eq.s32.totalorder %s22, 0
      %p117 = por %p115, %p116
      %p118 = scmp.ne.s32.totalorder %s107, %s110
      %p119 = scmp.eq.s32.totalorder %s27, 7
      %p120 = por %p118, %p119
      %p121 = scmp.ne.s32.totalorder %s110, %s111
      %p122 = scmp.eq.s32.totalorder %s27, 0
      %p123 = por %p121, %p122
      %p124 = scmp.ne.s32.totalorder %s110, %s111
      %p125 = scmp.eq.s32.totalorder %s28, 7
      %p126 = por %p124, %p125
      %p128 = scmp.ne.s32.totalorder %s111, %s127
      %p129 = scmp.eq.s32.totalorder %s28, 0
      %p130 = por %p128, %p129
      %s131 = ssub.s32 %s29, %s48
      %p132 = scmp.eq.s32.totalorder %s131, 0
      %s134 = sadd.s32 %s133, 1
      %s135 = scalar_select %p132, %s133, %s134
      %p138 = pneg %p132
      %p139 = scmp.eq.s32.totalorder %s22, 7
      %p140 = por %p138, %p139
      %p141 = scmp.ne.s32.totalorder %s133, %s136
      %p142 = scmp.eq.s32.totalorder %s22, 0
      %p143 = por %p141, %p142
      %p144 = scmp.ne.s32.totalorder %s133, %s136
      %p145 = scmp.eq.s32.totalorder %s27, 7
      %p146 = por %p144, %p145
      %p147 = scmp.ne.s32.totalorder %s136, %s137
      %p148 = scmp.eq.s32.totalorder %s27, 0
      %p149 = por %p147, %p148
      %p150 = scmp.ne.s32.totalorder %s136, %s137
      %p151 = scmp.eq.s32.totalorder %s28, 7
      %p152 = por %p150, %p151
      %p154 = scmp.ne.s32.totalorder %s137, %s153
      %p155 = scmp.eq.s32.totalorder %s28, 0
      %p156 = por %p154, %p155
      %s157 = ssub.s32 %s29, %s48
      %p158 = scmp.eq.s32.totalorder %s157, 0
      %s160 = sadd.s32 %s159, 1
      %s161 = scalar_select %p158, %s159, %s160
      %p164 = pneg %p158
      %p165 = scmp.eq.s32.totalorder %s22, 7
      %p166 = por %p164, %p165
      %p167 = scmp.ne.s32.totalorder %s159, %s162
      %p168 = scmp.eq.s32.totalorder %s22, 0
      %p169 = por %p167, %p168
      %p170 = scmp.ne.s32.totalorder %s159, %s162
      %p171 = scmp.eq.s32.totalorder %s27, 7
      %p172 = por %p170, %p171
      %p173 = scmp.ne.s32.totalorder %s162, %s163
      %p174 = scmp.eq.s32.totalorder %s27, 0
      %p175 = por %p173, %p174
      %p176 = scmp.ne.s32.totalorder %s162, %s163
      %p177 = scmp.eq.s32.totalorder %s28, 7
      %p178 = por %p176, %p177
      %p180 = scmp.ne.s32.totalorder %s163, %s179
      %p181 = scmp.eq.s32.totalorder %s28, 0
      %p182 = por %p180, %p181
      %s183 = ssub.s32 %s29, %s48
      %p184 = scmp.eq.s32.totalorder %s183, 0
      %s186 = sadd.s32 %s185, 1
      %s187 = scalar_select %p184, %s185, %s186
      %p190 = pneg %p184
      %p191 = scmp.eq.s32.totalorder %s22, 7
      %p192 = por %p190, %p191
      %p193 = scmp.ne.s32.totalorder %s185, %s188
      %p194 = scmp.eq.s32.totalorder %s22, 0
      %p195 = por %p193, %p194
      %p196 = scmp.ne.s32.totalorder %s185, %s188
      %p197 = scmp.eq.s32.totalorder %s27, 7
      %p198 = por %p196, %p197
      %p199 = scmp.ne.s32.totalorder %s188, %s189
      %p200 = scmp.eq.s32.totalorder %s27, 0
      %p201 = por %p199, %p200
      %p202 = scmp.ne.s32.totalorder %s188, %s189
      %p203 = scmp.eq.s32.totalorder %s28, 7
      %p204 = por %p202, %p203
      %p206 = scmp.ne.s32.totalorder %s189, %s205
      %p207 = scmp.eq.s32.totalorder %s28, 0
      %p208 = por %p206, %p207
      %s209 = ssub.s32 %s29, %s48
      %p210 = scmp.eq.s32.totalorder %s209, 0
      %s212 = sadd.s32 %s211, 1
      %s213 = scalar_select %p210, %s211, %s212
      %p216 = pneg %p210
      %p217 = scmp.eq.s32.totalorder %s22, 7
      %p218 = por %p216, %p217
      %p219 = scmp.ne.s32.totalorder %s211, %s214
      %p220 = scmp.eq.s32.totalorder %s22, 0
      %p221 = por %p219, %p220
      %p222 = scmp.ne.s32.totalorder %s211, %s214
      %p223 = scmp.eq.s32.totalorder %s27, 7
      %p224 = por %p222, %p223
      %p225 = scmp.ne.s32.totalorder %s214, %s215
      %p226 = scmp.eq.s32.totalorder %s27, 0
      %p227 = por %p225, %p226
      %p228 = scmp.ne.s32.totalorder %s214, %s215
      %p229 = scmp.eq.s32.totalorder %s28, 7
      %p230 = por %p228, %p229
      %p232 = scmp.ne.s32.totalorder %s215, %s231
      %p233 = scmp.eq.s32.totalorder %s28, 0
      %p234 = por %p232, %p233
      %s235 = ssub.s32 %s29, %s48
      %p236 = scmp.eq.s32.totalorder %s235, 0
      %s238 = sadd.s32 %s237, 1
      %s239 = scalar_select %p236, %s237, %s238
      %p242 = pneg %p236
      %p243 = scmp.eq.s32.totalorder %s22, 7
      %p244 = por %p242, %p243
      %p245 = scmp.ne.s32.totalorder %s237, %s240
      %p246 = scmp.eq.s32.totalorder %s22, 0
      %p247 = por %p245, %p246
      %p248 = scmp.ne.s32.totalorder %s237, %s240
      %p249 = scmp.eq.s32.totalorder %s27, 7
      %p250 = por %p248, %p249
      %p251 = scmp.ne.s32.totalorder %s240, %s241
      %p252 = scmp.eq.s32.totalorder %s27, 0
      %p253 = por %p251, %p252
      %p254 = scmp.ne.s32.totalorder %s240, %s241
      %p255 = scmp.eq.s32.totalorder %s28, 7
      %p256 = por %p254, %p255
      %p258 = scmp.ne.s32.totalorder %s241, %s257
      %p259 = scmp.eq.s32.totalorder %s28, 0
      %p260 = por %p258, %p259
      %p261 = scmp.le.s32.totalorder 1, %s22
      %p262 = scmp.lt.s32.totalorder %s22, 9
      %p263 = pnand %p261, %p262
      %p264 = pneg %p263
      // Predicated region
      $region9: #{tpu_custom_call.1} parent=5 // pred_check
        _
      $region10: #{tpu_custom_call.1} parent=5 // pred_check_branch
        %266 = sbr.rel (%p263) target = $region12
      $region11: #{tpu_custom_call.1} parent=5 // pred_region
        %s267 = ssub.s32 %s22, 1
      $region12: #{tpu_custom_call.1} parent=5 // pred_fallthru
        _
      %p268 = scmp.lt.s32.totalorder %s22, 8
      // Predicated region
      $region13: #{tpu_custom_call.1} parent=5 // pred_check
        %p269 = pneg %p268
      $region14: #{tpu_custom_call.1} parent=5 // pred_check_branch
        %271 = sbr.rel (%p269) target = $region16
      $region15: #{tpu_custom_call.1} parent=5 // pred_region
        // Predicated region
        $region17: #{tpu_custom_call.1} parent=15 // pred_check
          %p272 = pneg %p65
        $region18: #{tpu_custom_call.1} parent=15 // pred_check_branch
          %274 = sbr.rel (%p272) target = $region20
        $region19: #{tpu_custom_call.1} parent=15 // pred_region
          %s275 = smul.u32 32, %s31
          %p276 = scmp.lt.s32.totalorder %s29, 3
          %s277 = scalar_select %p276, %s29, 3
          %p278 = scmp.lt.s32.totalorder %s30, 1
          %s279 = scalar_select %p278, %s30, 1
          %p280 = scmp.lt.s32.totalorder %s275, 31
          %s281 = scalar_select %p280, %s275, 31
          %s282 = smul.addr %s279, 32
          %s283 = sadd.s32 %s281, %s282
          %s284 = smul.addr %s277, 64
          %s285 = sadd.s32 %s283, %s284
          %s286 = smul.addr %s285, 4
          %s287 = scalar_lea.vmem %s0, %s286
          %s288 = smul.u32 32, %s31
        $region20: #{tpu_custom_call.1} parent=15 // pred_fallthru
          _
        // Predicated region
        $region21: #{tpu_custom_call.1} parent=15 // pred_check
          %p289 = pneg %p91
        $region22: #{tpu_custom_call.1} parent=15 // pred_check_branch
          %291 = sbr.rel (%p289) target = $region24
        $region23: #{tpu_custom_call.1} parent=15 // pred_region
          %s292 = sand.u32 %s81, 1
          %s293 = scalar_lea.sflag [#allocation4], %s292
          %s294 = sand.u32 %s81, 1
          %s295 = smul.addr %s294, 128
          %s296 = scalar_lea.vmem [#allocation3], %s295
          %s298 = ssub.s32 2048, 2048
          %299 = vsyncadd %s293, %s298
          %s300 = smul.addr %s29, 32
          %s301 = smul.addr %s300, 64
          %s302 = scalar_lea.hbm %s1, %s301
          %s303 = sshll.u32 %s296, 4
          %s304 = int_to_ptr.vmem [resolvable:$true] %s303
          %309 = dma.hbm_to_vmem [thread:$0]  %s302, 2048, %s304, %s293, 128, 128, 8
        $region24: #{tpu_custom_call.1} parent=15 // pred_fallthru
          _
        // Predicated region
        $region25: #{tpu_custom_call.1} parent=15 // pred_check
          %p310 = pneg %p117
        $region26: #{tpu_custom_call.1} parent=15 // pred_check_branch
          %312 = sbr.rel (%p310) target = $region28
        $region27: #{tpu_custom_call.1} parent=15 // pred_region
          %p313 = scmp.lt.s32.totalorder %s29, 3
          %s314 = scalar_select %p313, %s29, 3
          %s315 = smul.addr %s314, 2
          %s316 = scalar_lea.vmem %s2, %s315
        $region28: #{tpu_custom_call.1} parent=15 // pred_fallthru
          _
        // Predicated region
        $region29: #{tpu_custom_call.1} parent=15 // pred_check
          %p317 = pneg %p143
        $region30: #{tpu_custom_call.1} parent=15 // pred_check_branch
          %319 = sbr.rel (%p317) target = $region32
        $region31: #{tpu_custom_call.1} parent=15 // pred_region
          %s320 = sand.u32 %s133, 1
          %s321 = scalar_lea.sflag [#allocation7], %s320
          %s322 = sand.u32 %s133, 1
          %s323 = smul.addr %s322, 512
          %s324 = scalar_lea.vmem [#allocation6], %s323
          %s326 = ssub.s32 8192, 8192
          %327 = vsyncadd %s321, %s326
          %s328 = smul.addr %s29, 64
          %s329 = smul.addr %s328, 128
          %s330 = scalar_lea.hbm %s3, %s329
          %s331 = sshll.u32 %s324, 4
          %s332 = int_to_ptr.vmem [resolvable:$true] %s331
          %337 = dma.hbm_to_vmem [thread:$0]  %s330, 8192, %s332, %s321, 256, 256, 16
        $region32: #{tpu_custom_call.1} parent=15 // pred_fallthru
          _
        // Predicated region
        $region33: #{tpu_custom_call.1} parent=15 // pred_check
          %p338 = pneg %p169
        $region34: #{tpu_custom_call.1} parent=15 // pred_check_branch
          %340 = sbr.rel (%p338) target = $region36
        $region35: #{tpu_custom_call.1} parent=15 // pred_region
          %p341 = scmp.lt.s32.totalorder %s29, 3
          %s342 = scalar_select %p341, %s29, 3
          %s343 = smul.addr %s342, 2
          %s344 = scalar_lea.vmem %s4, %s343
        $region36: #{tpu_custom_call.1} parent=15 // pred_fallthru
          _
        // Predicated region
        $region37: #{tpu_custom_call.1} parent=15 // pred_check
          %p345 = pneg %p195
        $region38: #{tpu_custom_call.1} parent=15 // pred_check_branch
          %347 = sbr.rel (%p345) target = $region40
        $region39: #{tpu_custom_call.1} parent=15 // pred_region
          %p348 = scmp.lt.s32.totalorder %s29, 3
          %s349 = scalar_select %p348, %s29, 3
          %s350 = smul.addr %s349, 32
          %s351 = smul.addr %s350, 8
          %s352 = scalar_lea.vmem %s5, %s351
        $region40: #{tpu_custom_call.1} parent=15 // pred_fallthru
          _
        // Predicated region
        $region41: #{tpu_custom_call.1} parent=15 // pred_check
          %p353 = pneg %p221
        $region42: #{tpu_custom_call.1} parent=15 // pred_check_branch
          %355 = sbr.rel (%p353) target = $region44
        $region43: #{tpu_custom_call.1} parent=15 // pred_region
          %p356 = scmp.lt.s32.totalorder %s29, 3
          %s357 = scalar_select %p356, %s29, 3
          %s358 = scalar_lea.vmem %s6, %s357
        $region44: #{tpu_custom_call.1} parent=15 // pred_fallthru
          _
      $region16: #{tpu_custom_call.1} parent=5 // pred_fallthru
        _
      %p359 = scmp.le.s32.totalorder 1, %s22
      %p360 = scmp.lt.s32.totalorder %s22, 9
      %p361 = pnand %p359, %p360
      %p362 = pneg %p361
      // Predicated region
      $region45: #{tpu_custom_call.1} parent=5 // pred_check
        _
      $region46: #{tpu_custom_call.1} parent=5 // pred_check_branch
        %364 = sbr.rel (%p361) target = $region48
      $region47: #{tpu_custom_call.1} parent=5 // pred_region
        %s365 = ssub.s32 %s22, 1
        %s366 = sand.u32 %s84, 1
        %s367 = scalar_lea.sflag [#allocation4], %s366
        %s368 = sand.u32 %s84, 1
        %s369 = smul.addr %s368, 128
        %s370 = scalar_lea.vmem [#allocation3], %s369
        // Predicated region
        $region49: #{tpu_custom_call.1} parent=47 // pred_check
          %p371 = pneg %p97
        $region50: #{tpu_custom_call.1} parent=47 // pred_check_branch
          %373 = sbr.rel (%p371) target = $region52
        $region51: #{tpu_custom_call.1} parent=47 // pred_region
          %374 = dma.done %s367, 2048
        $region52: #{tpu_custom_call.1} parent=47 // pred_fallthru
          _
        %s375 = sand.u32 %s136, 1
        %s376 = scalar_lea.sflag [#allocation7], %s375
        %s377 = sand.u32 %s136, 1
        %s378 = smul.addr %s377, 512
        %s379 = scalar_lea.vmem [#allocation6], %s378
        // Predicated region
        $region53: #{tpu_custom_call.1} parent=47 // pred_check
          %p380 = pneg %p149
        $region54: #{tpu_custom_call.1} parent=47 // pred_check_branch
          %382 = sbr.rel (%p380) target = $region56
        $region55: #{tpu_custom_call.1} parent=47 // pred_region
          %383 = dma.done %s376, 8192
        $region56: #{tpu_custom_call.1} parent=47 // pred_fallthru
          _
        %s384 = smul.u32 32, %s34
        %p385 = scmp.lt.s32.totalorder %s32, 3
        %s386 = scalar_select %p385, %s32, 3
        %p387 = scmp.lt.s32.totalorder %s33, 1
        %s388 = scalar_select %p387, %s33, 1
        %p389 = scmp.lt.s32.totalorder %s384, 31
        %s390 = scalar_select %p389, %s384, 31
        %s391 = smul.addr %s388, 32
        %s392 = sadd.s32 %s390, %s391
        %s393 = smul.addr %s386, 64
        %s394 = sadd.s32 %s392, %s393
        %s395 = smul.addr %s394, 4
        %s396 = scalar_lea.vmem %s0, %s395
        %p397 = pneg %p71
        %p398 = pneg %p68
        %s399 = sand.u32 %s84, 1
        %s400 = scalar_lea.sflag [#allocation4], %s399
        %s401 = sand.u32 %s84, 1
        %s402 = smul.addr %s401, 128
        %s403 = scalar_lea.vmem [#allocation3], %s402
        %p404 = pneg %p97
        %p405 = pneg %p94
        %p406 = scmp.lt.s32.totalorder %s32, 3
        %s407 = scalar_select %p406, %s32, 3
        %s408 = smul.addr %s407, 2
        %s409 = scalar_lea.vmem %s2, %s408
        %p410 = pneg %p123
        %p411 = pneg %p120
        %s412 = sand.u32 %s136, 1
        %s413 = scalar_lea.sflag [#allocation7], %s412
        %s414 = sand.u32 %s136, 1
        %s415 = smul.addr %s414, 512
        %s416 = scalar_lea.vmem [#allocation6], %s415
        %p417 = pneg %p149
        %p418 = pneg %p146
        %p419 = scmp.lt.s32.totalorder %s32, 3
        %s420 = scalar_select %p419, %s32, 3
        %s421 = smul.addr %s420, 2
        %s422 = scalar_lea.vmem %s4, %s421
        %p423 = pneg %p175
        %p424 = pneg %p172
        %p425 = scmp.lt.s32.totalorder %s32, 3
        %s426 = scalar_select %p425, %s32, 3
        %s427 = smul.addr %s426, 32
        %s428 = smul.addr %s427, 8
        %s429 = scalar_lea.vmem %s5, %s428
        %p430 = pneg %p201
        %p431 = pneg %p198
        %p432 = scmp.lt.s32.totalorder %s32, 3
        %s433 = scalar_select %p432, %s32, 3
        %s434 = scalar_lea.vmem %s6, %s433
        %p435 = pneg %p227
        %p436 = pneg %p224
        %p437 = pneg %p253
        %p438 = pneg %p250
        %s439 = sand.u32 %s240, 1
        %s440 = scalar_lea.sflag [#allocation5], %s439
        %s441 = sand.u32 %s240, 1
        %s442 = smul.addr %s441, 2
        %s443 = scalar_lea.vmem [#allocation8], %s442
        %s444 = smul.u32 32, %s34
        %p445 = scmp.lt.s32.totalorder %s32, 3
        %s446 = scalar_select %p445, %s32, 3
        %p447 = scmp.lt.s32.totalorder %s33, 1
        %s448 = scalar_select %p447, %s33, 1
        %p449 = scmp.lt.s32.totalorder %s444, 31
        %s450 = scalar_select %p449, %s444, 31
        %s451 = smul.addr %s448, 32
        %s452 = sadd.s32 %s450, %s451
        %s453 = smul.addr %s446, 64
        %s454 = sadd.s32 %s452, %s453
        %s455 = smul.addr %s454, 4
        %s456 = scalar_lea.vmem %s0, %s455
        %s457 = smul.u32 32, %s34
        %p458 = scmp.lt.s32.totalorder %s32, 3
        %s459 = scalar_select %p458, %s32, 3
        %s460 = smul.addr %s459, 2
        %s461 = scalar_lea.vmem %s2, %s460
        %p462 = scmp.lt.s32.totalorder %s32, 3
        %s463 = scalar_select %p462, %s32, 3
        %s464 = smul.addr %s463, 2
        %s465 = scalar_lea.vmem %s4, %s464
        %p466 = scmp.lt.s32.totalorder %s32, 3
        %s467 = scalar_select %p466, %s32, 3
        %s468 = smul.addr %s467, 32
        %s469 = smul.addr %s468, 8
        %s470 = scalar_lea.vmem %s5, %s469
        %p471 = scmp.lt.s32.totalorder %s32, 3
        %s472 = scalar_select %p471, %s32, 3
        %s473 = scalar_lea.vmem %s6, %s472
        %p475 = scmp.eq.s32.totalorder %s34, 0
        // Predicated region
        $region57: #{tpu_custom_call.1} parent=47 // pred_check
          %p476 = pneg %p475
        $region58: #{tpu_custom_call.1} parent=47 // pred_check_branch
          %478 = sbr.rel (%p476) target = $region60
        $region59: #{tpu_custom_call.1} parent=47 // pred_region
          %v479 = vlaneseq
          %vm480 = vcmp.ge.s32.totalorder %v479, 0
          %vm481 = vcmp.lt.s32.totalorder %v479, 256
          %vm482 = vmand %vm480, %vm481
          %483 = vst.msk [vmem:[#allocation2] sm:$0x3] %vm482, 0.0
        $region60: #{tpu_custom_call.1} parent=47 // pred_fallthru
          _
        %v484 = vld [vmem:[%s456] sm:$0xf]
        %v485 = vld [vmem:[%s456 + $0x4] sm:$0xf]
        %v486 = vld [vmem:[%s456 + $0x8] sm:$0xf]
        %v487 = vld [vmem:[%s456 + $0xc] sm:$0xf]
        %v488 = vld [vmem:[%s456 + $0x10] sm:$0xf]
        %v489 = vld [vmem:[%s456 + $0x14] sm:$0xf]
        %v490 = vld [vmem:[%s456 + $0x18] sm:$0xf]
        %v491 = vld [vmem:[%s456 + $0x1c] sm:$0xf]
        %v492 = vld [vmem:[%s456 + $0x20] sm:$0xf]
        %v493 = vld [vmem:[%s456 + $0x24] sm:$0xf]
        %v494 = vld [vmem:[%s456 + $0x28] sm:$0xf]
        %v495 = vld [vmem:[%s456 + $0x2c] sm:$0xf]
        %v496 = vld [vmem:[%s456 + $0x30] sm:$0xf]
        %v497 = vld [vmem:[%s456 + $0x34] sm:$0xf]
        %v498 = vld [vmem:[%s456 + $0x38] sm:$0xf]
        %v499 = vld [vmem:[%s456 + $0x3c] sm:$0xf]
        %v500 = vld [vmem:[%s456 + $0x40] sm:$0xf]
        %v501 = vld [vmem:[%s456 + $0x44] sm:$0xf]
        %v502 = vld [vmem:[%s456 + $0x48] sm:$0xf]
        %v503 = vld [vmem:[%s456 + $0x4c] sm:$0xf]
        %v504 = vld [vmem:[%s456 + $0x50] sm:$0xf]
        %v505 = vld [vmem:[%s456 + $0x54] sm:$0xf]
        %v506 = vld [vmem:[%s456 + $0x58] sm:$0xf]
        %v507 = vld [vmem:[%s456 + $0x5c] sm:$0xf]
        %v508 = vld [vmem:[%s456 + $0x60] sm:$0xf]
        %v509 = vld [vmem:[%s456 + $0x64] sm:$0xf]
        %v510 = vld [vmem:[%s456 + $0x68] sm:$0xf]
        %v511 = vld [vmem:[%s456 + $0x6c] sm:$0xf]
        %v512 = vld [vmem:[%s456 + $0x70] sm:$0xf]
        %v513 = vld [vmem:[%s456 + $0x74] sm:$0xf]
        %v514 = vld [vmem:[%s456 + $0x78] sm:$0xf]
        %v515 = vld [vmem:[%s456 + $0x7c] sm:$0xf]
        %v516 = vld [vmem:[%s370] sm:$0xff]
        %v517 = vld [vmem:[%s370 + $0x8] sm:$0xff]
        %v518 = vld [vmem:[%s370 + $0x10] sm:$0xff]
        %v519 = vld [vmem:[%s370 + $0x18] sm:$0xff]
        %v520 = vld [vmem:[%s370 + $0x20] sm:$0xff]
        %v521 = vld [vmem:[%s370 + $0x28] sm:$0xff]
        %v522 = vld [vmem:[%s370 + $0x30] sm:$0xff]
        %v523 = vld [vmem:[%s370 + $0x38] sm:$0xff]
        %v524 = vld [vmem:[%s370 + $0x40] sm:$0xff]
        %v525 = vld [vmem:[%s370 + $0x48] sm:$0xff]
        %v526 = vld [vmem:[%s370 + $0x50] sm:$0xff]
        %v527 = vld [vmem:[%s370 + $0x58] sm:$0xff]
        %v528 = vld [vmem:[%s370 + $0x60] sm:$0xff]
        %v529 = vld [vmem:[%s370 + $0x68] sm:$0xff]
        %v530 = vld [vmem:[%s370 + $0x70] sm:$0xff]
        %v531 = vld [vmem:[%s370 + $0x78] sm:$0xff]
        %v532 = vld [vmem:[%s461] sm:$0x3]
        %v534 = vlaneseq
        %v535 = vshrl.u32 %v534, 7
        %v536 = vsub.s32 0, %v535
        %v537 = vrot.slane %v532, %v536
        %v538 = vlaneseq
        %v539 = vshrl.u32 %v538, 7
        %v540 = vsub.s32 1, %v539
        %v541 = vrot.slane %v532, %v540
        %v576 = vunpack.c.l.b16 %v484
        %v577 = vunpack.c.l.b16 %v485
        %v578 = vunpack.c.l.b16 %v486
        %v579 = vunpack.c.l.b16 %v487
        %v580 = vunpack.c.l.b16 %v488
        %v581 = vunpack.c.l.b16 %v489
        %v582 = vunpack.c.l.b16 %v490
        %v583 = vunpack.c.l.b16 %v491
        %v584 = vunpack.c.l.b16 %v492
        %v585 = vunpack.c.l.b16 %v493
        %v586 = vunpack.c.l.b16 %v494
        %v587 = vunpack.c.l.b16 %v495
        %v588 = vunpack.c.l.b16 %v496
        %v589 = vunpack.c.l.b16 %v497
        %v590 = vunpack.c.l.b16 %v498
        %v591 = vunpack.c.l.b16 %v499
        %v592 = vunpack.c.l.b16 %v500
        %v593 = vunpack.c.l.b16 %v501
        %v594 = vunpack.c.l.b16 %v502
        %v595 = vunpack.c.l.b16 %v503
        %v596 = vunpack.c.l.b16 %v504
        %v597 = vunpack.c.l.b16 %v505
        %v598 = vunpack.c.l.b16 %v506
        %v599 = vunpack.c.l.b16 %v507
        %v600 = vunpack.c.l.b16 %v508
        %v601 = vunpack.c.l.b16 %v509
        %v602 = vunpack.c.l.b16 %v510
        %v603 = vunpack.c.l.b16 %v511
        %v604 = vunpack.c.l.b16 %v512
        %v605 = vunpack.c.l.b16 %v513
        %v606 = vunpack.c.l.b16 %v514
        %v607 = vunpack.c.l.b16 %v515
        %v608 = vpack.c.b16 %v577, %v576
        %v609 = vpack.c.b16 %v579, %v578
        %v610 = vpack.c.b16 %v581, %v580
        %v611 = vpack.c.b16 %v583, %v582
        %v612 = vpack.c.b16 %v585, %v584
        %v613 = vpack.c.b16 %v587, %v586
        %v614 = vpack.c.b16 %v589, %v588
        %v615 = vpack.c.b16 %v591, %v590
        %v616 = vpack.c.b16 %v593, %v592
        %v617 = vpack.c.b16 %v595, %v594
        %v618 = vpack.c.b16 %v597, %v596
        %v619 = vpack.c.b16 %v599, %v598
        %v620 = vpack.c.b16 %v601, %v600
        %v621 = vpack.c.b16 %v603, %v602
        %v622 = vpack.c.b16 %v605, %v604
        %v623 = vpack.c.b16 %v607, %v606
        %v656 = vunpack.c.l.b16 %v516
        %v657 = vunpack.c.h.b16 %v516
        %v658 = vunpack.c.l.b16 %v517
        %v659 = vunpack.c.h.b16 %v517
        %v660 = vunpack.c.l.b16 %v518
        %v661 = vunpack.c.h.b16 %v518
        %v662 = vunpack.c.l.b16 %v519
        %v663 = vunpack.c.h.b16 %v519
        %v664 = vunpack.c.l.b16 %v520
        %v665 = vunpack.c.h.b16 %v520
        %v666 = vunpack.c.l.b16 %v521
        %v667 = vunpack.c.h.b16 %v521
        %v668 = vunpack.c.l.b16 %v522
        %v669 = vunpack.c.h.b16 %v522
        %v670 = vunpack.c.l.b16 %v523
        %v671 = vunpack.c.h.b16 %v523
        %v672 = vunpack.c.l.b16 %v524
        %v673 = vunpack.c.h.b16 %v524
        %v674 = vunpack.c.l.b16 %v525
        %v675 = vunpack.c.h.b16 %v525
        %v676 = vunpack.c.l.b16 %v526
        %v677 = vunpack.c.h.b16 %v526
        %v678 = vunpack.c.l.b16 %v527
        %v679 = vunpack.c.h.b16 %v527
        %v680 = vunpack.c.l.b16 %v528
        %v681 = vunpack.c.h.b16 %v528
        %v682 = vunpack.c.l.b16 %v529
        %v683 = vunpack.c.h.b16 %v529
        %v684 = vunpack.c.l.b16 %v530
        %v685 = vunpack.c.h.b16 %v530
        %v686 = vunpack.c.l.b16 %v531
        %v687 = vunpack.c.h.b16 %v531
        %v688 = vpack.c.b16 %v658, %v656
        %v689 = vpack.c.b16 %v659, %v657
        %v690 = vpack.c.b16 %v662, %v660
        %v691 = vpack.c.b16 %v663, %v661
        %v692 = vpack.c.b16 %v666, %v664
        %v693 = vpack.c.b16 %v667, %v665
        %v694 = vpack.c.b16 %v670, %v668
        %v695 = vpack.c.b16 %v671, %v669
        %v696 = vpack.c.b16 %v674, %v672
        %v697 = vpack.c.b16 %v675, %v673
        %v698 = vpack.c.b16 %v678, %v676
        %v699 = vpack.c.b16 %v679, %v677
        %v700 = vpack.c.b16 %v682, %v680
        %v701 = vpack.c.b16 %v683, %v681
        %v702 = vpack.c.b16 %v686, %v684
        %v703 = vpack.c.b16 %v687, %v685
        %720 = vmatprep.subr.bf16.mxu0 %v689
        %721 = vmatpush1.bf16.msra.mxu0 %v688
        %722 = vmatprep.subr.bf16.mxu0 %v691
        %723 = vmatpush1.bf16.msra.mxu0 %v690
        %724 = vmatprep.subr.bf16.mxu0 %v693
        %725 = vmatpush1.bf16.msra.mxu0 %v692
        %726 = vmatprep.subr.bf16.mxu0 %v695
        %727 = vmatpush1.bf16.msra.mxu0 %v694
        %728 = vmatprep.subr.bf16.mxu0 %v697
        %729 = vmatpush1.bf16.msra.mxu0 %v696
        %730 = vmatprep.subr.bf16.mxu0 %v699
        %731 = vmatpush1.bf16.msra.mxu0 %v698
        %732 = vmatprep.subr.bf16.mxu0 %v701
        %733 = vmatpush1.bf16.msra.mxu0 %v700
        %734 = vmatprep.subr.bf16.mxu0 %v703
        %735 = vmatpush1.bf16.msra.mxu0 %v702
        %736 = vmatprep.subr.bf16.mxu0 0
        %737 = vmatpush1.bf16.msra.mxu0 0
        %738 = vmatprep.subr.bf16.mxu0 0
        %739 = vmatpush1.bf16.msra.mxu0 0
        %740 = vmatprep.subr.bf16.mxu0 0
        %741 = vmatpush1.bf16.msra.mxu0 0
        %742 = vmatprep.subr.bf16.mxu0 0
        %743 = vmatpush1.bf16.msra.mxu0 0
        %744 = vmatprep.subr.bf16.mxu0 0
        %745 = vmatpush1.bf16.msra.mxu0 0
        %746 = vmatprep.subr.bf16.mxu0 0
        %747 = vmatpush1.bf16.msra.mxu0 0
        %748 = vmatprep.subr.bf16.mxu0 0
        %749 = vmatpush1.bf16.msra.mxu0 0
        %750 = vmatprep.subr.bf16.mxu0 0
        %751 = vmatpush1.bf16.msra.mxu0 0
        %752 = vmatprep.mubr.bf16.mxu0 0
        %753 = vmatmul.mubr.bf16.gmra.mrb[0].mxu0 %v608
        %v754 = vpop.f32.mrb[0].mxu0
        %v755 = vadd.f32 %v537, %v754
        %v756 = vpop.f32.mrb[0].mxu0
        %v757 = vadd.f32 %v541, %v756
        %v758 = vpop.f32.mrb[0].mxu0
        %v759 = vadd.f32 %v537, %v758
        %v760 = vpop.f32.mrb[0].mxu0
        %v761 = vadd.f32 %v541, %v760
        %762 = vmatprep.mubr.bf16.mxu0 0
        %763 = vmatmul.mubr.bf16.gmra.mrb[0].mxu0 %v609
        %v764 = vpop.f32.mrb[0].mxu0
        %v765 = vadd.f32 %v537, %v764
        %v766 = vpop.f32.mrb[0].mxu0
        %v767 = vadd.f32 %v541, %v766
        %v768 = vpop.f32.mrb[0].mxu0
        %v769 = vadd.f32 %v537, %v768
        %v770 = vpop.f32.mrb[0].mxu0
        %v771 = vadd.f32 %v541, %v770
        %772 = vmatprep.mubr.bf16.mxu0 0
        %773 = vmatmul.mubr.bf16.gmra.mrb[0].mxu0 %v610
        %v774 = vpop.f32.mrb[0].mxu0
        %v775 = vadd.f32 %v537, %v774
        %v776 = vpop.f32.mrb[0].mxu0
        %v777 = vadd.f32 %v541, %v776
        %v778 = vpop.f32.mrb[0].mxu0
        %v779 = vadd.f32 %v537, %v778
        %v780 = vpop.f32.mrb[0].mxu0
        %v781 = vadd.f32 %v541, %v780
        %782 = vmatprep.mubr.bf16.mxu0 0
        %783 = vmatmul.mubr.bf16.gmra.mrb[0].mxu0 %v611
        %v784 = vpop.f32.mrb[0].mxu0
        %v785 = vadd.f32 %v537, %v784
        %v786 = vpop.f32.mrb[0].mxu0
        %v787 = vadd.f32 %v541, %v786
        %v788 = vpop.f32.mrb[0].mxu0
        %v789 = vadd.f32 %v537, %v788
        %v790 = vpop.f32.mrb[0].mxu0
        %v791 = vadd.f32 %v541, %v790
        %792 = vmatprep.mubr.bf16.mxu0 0
        %793 = vmatmul.mubr.bf16.gmra.mrb[0].mxu0 %v612
        %v794 = vpop.f32.mrb[0].mxu0
        %v795 = vadd.f32 %v537, %v794
        %v796 = vpop.f32.mrb[0].mxu0
        %v797 = vadd.f32 %v541, %v796
        %v798 = vpop.f32.mrb[0].mxu0
        %v799 = vadd.f32 %v537, %v798
        %v800 = vpop.f32.mrb[0].mxu0
        %v801 = vadd.f32 %v541, %v800
        %802 = vmatprep.mubr.bf16.mxu0 0
        %803 = vmatmul.mubr.bf16.gmra.mrb[0].mxu0 %v613
        %v804 = vpop.f32.mrb[0].mxu0
        %v805 = vadd.f32 %v537, %v804
        %v806 = vpop.f32.mrb[0].mxu0
        %v807 = vadd.f32 %v541, %v806
        %v808 = vpop.f32.mrb[0].mxu0
        %v809 = vadd.f32 %v537, %v808
        %v810 = vpop.f32.mrb[0].mxu0
        %v811 = vadd.f32 %v541, %v810
        %812 = vmatprep.mubr.bf16.mxu0 0
        %813 = vmatmul.mubr.bf16.gmra.mrb[0].mxu0 %v614
        %v814 = vpop.f32.mrb[0].mxu0
        %v815 = vadd.f32 %v537, %v814
        %v816 = vpop.f32.mrb[0].mxu0
        %v817 = vadd.f32 %v541, %v816
        %v818 = vpop.f32.mrb[0].mxu0
        %v819 = vadd.f32 %v537, %v818
        %v820 = vpop.f32.mrb[0].mxu0
        %v821 = vadd.f32 %v541, %v820
        %822 = vmatprep.mubr.bf16.mxu0 0
        %823 = vmatmul.mubr.bf16.gmra.mrb[0].mxu0 %v615
        %v824 = vpop.f32.mrb[0].mxu0
        %v825 = vadd.f32 %v537, %v824
        %v826 = vpop.f32.mrb[0].mxu0
        %v827 = vadd.f32 %v541, %v826
        %v828 = vpop.f32.mrb[0].mxu0
        %v829 = vadd.f32 %v537, %v828
        %v830 = vpop.f32.mrb[0].mxu0
        %v831 = vadd.f32 %v541, %v830
        %832 = vmatprep.mubr.bf16.mxu0 0
        %833 = vmatmul.mubr.bf16.gmra.mrb[0].mxu0 %v616
        %v834 = vpop.f32.mrb[0].mxu0
        %v835 = vadd.f32 %v537, %v834
        %v836 = vpop.f32.mrb[0].mxu0
        %v837 = vadd.f32 %v541, %v836
        %v838 = vpop.f32.mrb[0].mxu0
        %v839 = vadd.f32 %v537, %v838
        %v840 = vpop.f32.mrb[0].mxu0
        %v841 = vadd.f32 %v541, %v840
        %842 = vmatprep.mubr.bf16.mxu0 0
        %843 = vmatmul.mubr.bf16.gmra.mrb[0].mxu0 %v617
        %v844 = vpop.f32.mrb[0].mxu0
        %v845 = vadd.f32 %v537, %v844
        %v846 = vpop.f32.mrb[0].mxu0
        %v847 = vadd.f32 %v541, %v846
        %v848 = vpop.f32.mrb[0].mxu0
        %v849 = vadd.f32 %v537, %v848
        %v850 = vpop.f32.mrb[0].mxu0
        %v851 = vadd.f32 %v541, %v850
        %852 = vmatprep.mubr.bf16.mxu0 0
        %853 = vmatmul.mubr.bf16.gmra.mrb[0].mxu0 %v618
        %v854 = vpop.f32.mrb[0].mxu0
        %v855 = vadd.f32 %v537, %v854
        %v856 = vpop.f32.mrb[0].mxu0
        %v857 = vadd.f32 %v541, %v856
        %v858 = vpop.f32.mrb[0].mxu0
        %v859 = vadd.f32 %v537, %v858
        %v860 = vpop.f32.mrb[0].mxu0
        %v861 = vadd.f32 %v541, %v860
        %862 = vmatprep.mubr.bf16.mxu0 0
        %863 = vmatmul.mubr.bf16.gmra.mrb[0].mxu0 %v619
        %v864 = vpop.f32.mrb[0].mxu0
        %v865 = vadd.f32 %v537, %v864
        %v866 = vpop.f32.mrb[0].mxu0
        %v867 = vadd.f32 %v541, %v866
        %v868 = vpop.f32.mrb[0].mxu0
        %v869 = vadd.f32 %v537, %v868
        %v870 = vpop.f32.mrb[0].mxu0
        %v871 = vadd.f32 %v541, %v870
        %872 = vmatprep.mubr.bf16.mxu0 0
        %873 = vmatmul.mubr.bf16.gmra.mrb[0].mxu0 %v620
        %v874 = vpop.f32.mrb[0].mxu0
        %v875 = vadd.f32 %v537, %v874
        %v876 = vpop.f32.mrb[0].mxu0
        %v877 = vadd.f32 %v541, %v876
        %v878 = vpop.f32.mrb[0].mxu0
        %v879 = vadd.f32 %v537, %v878
        %v880 = vpop.f32.mrb[0].mxu0
        %v881 = vadd.f32 %v541, %v880
        %882 = vmatprep.mubr.bf16.mxu0 0
        %883 = vmatmul.mubr.bf16.gmra.mrb[0].mxu0 %v621
        %v884 = vpop.f32.mrb[0].mxu0
        %v885 = vadd.f32 %v537, %v884
        %v886 = vpop.f32.mrb[0].mxu0
        %v887 = vadd.f32 %v541, %v886
        %v888 = vpop.f32.mrb[0].mxu0
        %v889 = vadd.f32 %v537, %v888
        %v890 = vpop.f32.mrb[0].mxu0
        %v891 = vadd.f32 %v541, %v890
        %892 = vmatprep.mubr.bf16.mxu0 0
        %893 = vmatmul.mubr.bf16.gmra.mrb[0].mxu0 %v622
        %v894 = vpop.f32.mrb[0].mxu0
        %v895 = vadd.f32 %v537, %v894
        %v896 = vpop.f32.mrb[0].mxu0
        %v897 = vadd.f32 %v541, %v896
        %v898 = vpop.f32.mrb[0].mxu0
        %v899 = vadd.f32 %v537, %v898
        %v900 = vpop.f32.mrb[0].mxu0
        %v901 = vadd.f32 %v541, %v900
        %902 = vmatprep.mubr.bf16.mxu0 0
        %903 = vmatmul.mubr.bf16.gmra.mrb[0].mxu0 %v623
        %v904 = vpop.f32.mrb[0].mxu0
        %v905 = vadd.f32 %v537, %v904
        %v906 = vpop.f32.mrb[0].mxu0
        %v907 = vadd.f32 %v541, %v906
        %v908 = vpop.f32.mrb[0].mxu0
        %v909 = vadd.f32 %v537, %v908
        %v910 = vpop.f32.mrb[0].mxu0
        %v911 = vadd.f32 %v541, %v910
        %912 = vdwg.mxu0
        %v913 = vmax.f32 %v755, 0.0
        %v914 = vmax.f32 %v757, 0.0
        %v915 = vmax.f32 %v759, 0.0
        %v916 = vmax.f32 %v761, 0.0
        %v917 = vmax.f32 %v765, 0.0
        %v918 = vmax.f32 %v767, 0.0
        %v919 = vmax.f32 %v769, 0.0
        %v920 = vmax.f32 %v771, 0.0
        %v921 = vmax.f32 %v775, 0.0
        %v922 = vmax.f32 %v777, 0.0
        %v923 = vmax.f32 %v779, 0.0
        %v924 = vmax.f32 %v781, 0.0
        %v925 = vmax.f32 %v785, 0.0
        %v926 = vmax.f32 %v787, 0.0
        %v927 = vmax.f32 %v789, 0.0
        %v928 = vmax.f32 %v791, 0.0
        %v929 = vmax.f32 %v795, 0.0
        %v930 = vmax.f32 %v797, 0.0
        %v931 = vmax.f32 %v799, 0.0
        %v932 = vmax.f32 %v801, 0.0
        %v933 = vmax.f32 %v805, 0.0
        %v934 = vmax.f32 %v807, 0.0
        %v935 = vmax.f32 %v809, 0.0
        %v936 = vmax.f32 %v811, 0.0
        %v937 = vmax.f32 %v815, 0.0
        %v938 = vmax.f32 %v817, 0.0
        %v939 = vmax.f32 %v819, 0.0
        %v940 = vmax.f32 %v821, 0.0
        %v941 = vmax.f32 %v825, 0.0
        %v942 = vmax.f32 %v827, 0.0
        %v943 = vmax.f32 %v829, 0.0
        %v944 = vmax.f32 %v831, 0.0
        %v945 = vmax.f32 %v835, 0.0
        %v946 = vmax.f32 %v837, 0.0
        %v947 = vmax.f32 %v839, 0.0
        %v948 = vmax.f32 %v841, 0.0
        %v949 = vmax.f32 %v845, 0.0
        %v950 = vmax.f32 %v847, 0.0
        %v951 = vmax.f32 %v849, 0.0
        %v952 = vmax.f32 %v851, 0.0
        %v953 = vmax.f32 %v855, 0.0
        %v954 = vmax.f32 %v857, 0.0
        %v955 = vmax.f32 %v859, 0.0
        %v956 = vmax.f32 %v861, 0.0
        %v957 = vmax.f32 %v865, 0.0
        %v958 = vmax.f32 %v867, 0.0
        %v959 = vmax.f32 %v869, 0.0
        %v960 = vmax.f32 %v871, 0.0
        %v961 = vmax.f32 %v875, 0.0
        %v962 = vmax.f32 %v877, 0.0
        %v963 = vmax.f32 %v879, 0.0
        %v964 = vmax.f32 %v881, 0.0
        %v965 = vmax.f32 %v885, 0.0
        %v966 = vmax.f32 %v887, 0.0
        %v967 = vmax.f32 %v889, 0.0
        %v968 = vmax.f32 %v891, 0.0
        %v969 = vmax.f32 %v895, 0.0
        %v970 = vmax.f32 %v897, 0.0
        %v971 = vmax.f32 %v899, 0.0
        %v972 = vmax.f32 %v901, 0.0
        %v973 = vmax.f32 %v905, 0.0
        %v974 = vmax.f32 %v907, 0.0
        %v975 = vmax.f32 %v909, 0.0
        %v976 = vmax.f32 %v911, 0.0
        %v977 = vld [vmem:[#allocation2] sm:$0x3]
        %v978 = vadd.f32 %v913, %v915
        %v979 = vadd.f32 %v978, %v917
        %v980 = vadd.f32 %v979, %v919
        %v981 = vadd.f32 %v980, %v921
        %v982 = vadd.f32 %v981, %v923
        %v983 = vadd.f32 %v982, %v925
        %v984 = vadd.f32 %v983, %v927
        %v985 = vadd.f32 %v984, %v929
        %v986 = vadd.f32 %v985, %v931
        %v987 = vadd.f32 %v986, %v933
        %v988 = vadd.f32 %v987, %v935
        %v989 = vadd.f32 %v988, %v937
        %v990 = vadd.f32 %v989, %v939
        %v991 = vadd.f32 %v990, %v941
        %v992 = vadd.f32 %v991, %v943
        %v993 = vadd.f32 %v992, %v945
        %v994 = vadd.f32 %v993, %v947
        %v995 = vadd.f32 %v994, %v949
        %v996 = vadd.f32 %v995, %v951
        %v997 = vadd.f32 %v996, %v953
        %v998 = vadd.f32 %v997, %v955
        %v999 = vadd.f32 %v998, %v957
        %v1000 = vadd.f32 %v999, %v959
        %v1001 = vadd.f32 %v1000, %v961
        %v1002 = vadd.f32 %v1001, %v963
        %v1003 = vadd.f32 %v1002, %v965
        %v1004 = vadd.f32 %v1003, %v967
        %v1005 = vadd.f32 %v1004, %v969
        %v1006 = vadd.f32 %v1005, %v971
        %v1007 = vadd.f32 %v1006, %v973
        %v1008 = vadd.f32 %v1007, %v975
        %v1009 = vrot.slane %v1008, 4
        %v1010 = vadd.f32 %v1008, %v1009
        %v1011 = vrot.slane %v1010, 2
        %v1012 = vadd.f32 %v1010, %v1011
        %v1013 = vrot.slane %v1012, 1
        %v1014 = vadd.f32 %v1012, %v1013
        %v1015 = vadd.f32 %v914, %v916
        %v1016 = vadd.f32 %v1015, %v918
        %v1017 = vadd.f32 %v1016, %v920
        %v1018 = vadd.f32 %v1017, %v922
        %v1019 = vadd.f32 %v1018, %v924
        %v1020 = vadd.f32 %v1019, %v926
        %v1021 = vadd.f32 %v1020, %v928
        %v1022 = vadd.f32 %v1021, %v930
        %v1023 = vadd.f32 %v1022, %v932
        %v1024 = vadd.f32 %v1023, %v934
        %v1025 = vadd.f32 %v1024, %v936
        %v1026 = vadd.f32 %v1025, %v938
        %v1027 = vadd.f32 %v1026, %v940
        %v1028 = vadd.f32 %v1027, %v942
        %v1029 = vadd.f32 %v1028, %v944
        %v1030 = vadd.f32 %v1029, %v946
        %v1031 = vadd.f32 %v1030, %v948
        %v1032 = vadd.f32 %v1031, %v950
        %v1033 = vadd.f32 %v1032, %v952
        %v1034 = vadd.f32 %v1033, %v954
        %v1035 = vadd.f32 %v1034, %v956
        %v1036 = vadd.f32 %v1035, %v958
        %v1037 = vadd.f32 %v1036, %v960
        %v1038 = vadd.f32 %v1037, %v962
        %v1039 = vadd.f32 %v1038, %v964
        %v1040 = vadd.f32 %v1039, %v966
        %v1041 = vadd.f32 %v1040, %v968
        %v1042 = vadd.f32 %v1041, %v970
        %v1043 = vadd.f32 %v1042, %v972
        %v1044 = vadd.f32 %v1043, %v974
        %v1045 = vadd.f32 %v1044, %v976
        %v1046 = vrot.slane %v1045, 4
        %v1047 = vadd.f32 %v1045, %v1046
        %v1048 = vrot.slane %v1047, 2
        %v1049 = vadd.f32 %v1047, %v1048
        %v1050 = vrot.slane %v1049, 1
        %v1051 = vadd.f32 %v1049, %v1050
        %v1054 = vcombine.low %v1014, %v1051
        %v1056 = vunpack.c.l.s4 1966171168
        %v1057 = vunpack.c.0.s8 %v1056
        %v1058 = vlaneseq
        %v1059 = vshrl.u32 %v1058, 7
        %v1060 = vsub.s32 %v1057, %v1059
        %v1061 = vrot.slane %v1054, %v1060
        %v1063 = vunpack.c.l.s4 1966171168
        %v1064 = vunpack.c.0.s8 %v1063
        %v1065 = vlaneseq
        %v1066 = vshrl.u32 %v1065, 7
        %v1067 = vsub.s32 %v1064, %v1066
        %v1068 = vrot.slane %v1061, %v1067
        %v1070 = vadd.f32 %v977, %v1068
        %v1071 = vlaneseq
        %vm1072 = vcmp.ge.s32.totalorder %v1071, 0
        %vm1073 = vcmp.lt.s32.totalorder %v1071, 256
        %vm1074 = vmand %vm1072, %vm1073
        %1075 = vst.msk [vmem:[#allocation2] sm:$0x3] %vm1074, %v1070
        // Predicated region
        $region61: #{tpu_custom_call.1} parent=47 // pred_check
          %p1076 = pneg %p475
        $region62: #{tpu_custom_call.1} parent=47 // pred_check_branch
          %1078 = sbr.rel (%p1076) target = $region64
        $region63: #{tpu_custom_call.1} parent=47 // pred_region
          %v1079 = vld [vmem:[#allocation2] sm:$0x3]
          %v1080 = vmul.f32 %v1079, 0.00390625
          %v1081 = vld [vmem:[%s379] sm:$0xff]
          %v1082 = vld [vmem:[%s379 + $0x8] sm:$0xff]
          %v1083 = vld [vmem:[%s379 + $0x10] sm:$0xff]
          %v1084 = vld [vmem:[%s379 + $0x18] sm:$0xff]
          %v1085 = vld [vmem:[%s379 + $0x20] sm:$0xff]
          %v1086 = vld [vmem:[%s379 + $0x28] sm:$0xff]
          %v1087 = vld [vmem:[%s379 + $0x30] sm:$0xff]
          %v1088 = vld [vmem:[%s379 + $0x38] sm:$0xff]
          %v1089 = vld [vmem:[%s379 + $0x40] sm:$0xff]
          %v1090 = vld [vmem:[%s379 + $0x48] sm:$0xff]
          %v1091 = vld [vmem:[%s379 + $0x50] sm:$0xff]
          %v1092 = vld [vmem:[%s379 + $0x58] sm:$0xff]
          %v1093 = vld [vmem:[%s379 + $0x60] sm:$0xff]
          %v1094 = vld [vmem:[%s379 + $0x68] sm:$0xff]
          %v1095 = vld [vmem:[%s379 + $0x70] sm:$0xff]
          %v1096 = vld [vmem:[%s379 + $0x78] sm:$0xff]
          %v1097 = vld [vmem:[%s379 + $0x80] sm:$0xff]
          %v1098 = vld [vmem:[%s379 + $0x88] sm:$0xff]
          %v1099 = vld [vmem:[%s379 + $0x90] sm:$0xff]
          %v1100 = vld [vmem:[%s379 + $0x98] sm:$0xff]
          %v1101 = vld [vmem:[%s379 + $0xa0] sm:$0xff]
          %v1102 = vld [vmem:[%s379 + $0xa8] sm:$0xff]
          %v1103 = vld [vmem:[%s379 + $0xb0] sm:$0xff]
          %v1104 = vld [vmem:[%s379 + $0xb8] sm:$0xff]
          %v1105 = vld [vmem:[%s379 + $0xc0] sm:$0xff]
          %v1106 = vld [vmem:[%s379 + $0xc8] sm:$0xff]
          %v1107 = vld [vmem:[%s379 + $0xd0] sm:$0xff]
          %v1108 = vld [vmem:[%s379 + $0xd8] sm:$0xff]
          %v1109 = vld [vmem:[%s379 + $0xe0] sm:$0xff]
          %v1110 = vld [vmem:[%s379 + $0xe8] sm:$0xff]
          %v1111 = vld [vmem:[%s379 + $0xf0] sm:$0xff]
          %v1112 = vld [vmem:[%s379 + $0xf8] sm:$0xff]
          %v1113 = vld [vmem:[%s379 + $0x100] sm:$0xff]
          %v1114 = vld [vmem:[%s379 + $0x108] sm:$0xff]
          %v1115 = vld [vmem:[%s379 + $0x110] sm:$0xff]
          %v1116 = vld [vmem:[%s379 + $0x118] sm:$0xff]
          %v1117 = vld [vmem:[%s379 + $0x120] sm:$0xff]
          %v1118 = vld [vmem:[%s379 + $0x128] sm:$0xff]
          %v1119 = vld [vmem:[%s379 + $0x130] sm:$0xff]
          %v1120 = vld [vmem:[%s379 + $0x138] sm:$0xff]
          %v1121 = vld [vmem:[%s379 + $0x140] sm:$0xff]
          %v1122 = vld [vmem:[%s379 + $0x148] sm:$0xff]
          %v1123 = vld [vmem:[%s379 + $0x150] sm:$0xff]
          %v1124 = vld [vmem:[%s379 + $0x158] sm:$0xff]
          %v1125 = vld [vmem:[%s379 + $0x160] sm:$0xff]
          %v1126 = vld [vmem:[%s379 + $0x168] sm:$0xff]
          %v1127 = vld [vmem:[%s379 + $0x170] sm:$0xff]
          %v1128 = vld [vmem:[%s379 + $0x178] sm:$0xff]
          %v1129 = vld [vmem:[%s379 + $0x180] sm:$0xff]
          %v1130 = vld [vmem:[%s379 + $0x188] sm:$0xff]
          %v1131 = vld [vmem:[%s379 + $0x190] sm:$0xff]
          %v1132 = vld [vmem:[%s379 + $0x198] sm:$0xff]
          %v1133 = vld [vmem:[%s379 + $0x1a0] sm:$0xff]
          %v1134 = vld [vmem:[%s379 + $0x1a8] sm:$0xff]
          %v1135 = vld [vmem:[%s379 + $0x1b0] sm:$0xff]
          %v1136 = vld [vmem:[%s379 + $0x1b8] sm:$0xff]
          %v1137 = vld [vmem:[%s379 + $0x1c0] sm:$0xff]
          %v1138 = vld [vmem:[%s379 + $0x1c8] sm:$0xff]
          %v1139 = vld [vmem:[%s379 + $0x1d0] sm:$0xff]
          %v1140 = vld [vmem:[%s379 + $0x1d8] sm:$0xff]
          %v1141 = vld [vmem:[%s379 + $0x1e0] sm:$0xff]
          %v1142 = vld [vmem:[%s379 + $0x1e8] sm:$0xff]
          %v1143 = vld [vmem:[%s379 + $0x1f0] sm:$0xff]
          %v1144 = vld [vmem:[%s379 + $0x1f8] sm:$0xff]
          %v1145 = vld [vmem:[%s465] sm:$0x3]
          %v1147 = vlaneseq
          %v1148 = vshrl.u32 %v1147, 7
          %v1149 = vsub.s32 0, %v1148
          %v1150 = vrot.slane %v1080, %v1149
          %v1151 = vlaneseq
          %v1152 = vshrl.u32 %v1151, 7
          %v1153 = vsub.s32 1, %v1152
          %v1154 = vrot.slane %v1080, %v1153
          %v1158 = vlaneseq
          %v1159 = vshrl.u32 %v1158, 7
          %v1160 = vsub.s32 0, %v1159
          %v1161 = vrot.slane %v1145, %v1160
          %v1162 = vlaneseq
          %v1163 = vshrl.u32 %v1162, 7
          %v1164 = vsub.s32 1, %v1163
          %v1165 = vrot.slane %v1145, %v1164
          %1168 = vmatprep.subr.mxu0 %v1082
          %1169 = vmatpush1.msra.mxu0 %v1081
          %1170 = vmatprep.subr.mxu0 %v1084
          %1171 = vmatpush1.msra.mxu0 %v1083
          %1172 = vmatprep.subr.mxu0 %v1086
          %1173 = vmatpush1.msra.mxu0 %v1085
          %1174 = vmatprep.subr.mxu0 %v1088
          %1175 = vmatpush1.msra.mxu0 %v1087
          %1176 = vmatprep.subr.mxu0 %v1090
          %1177 = vmatpush1.msra.mxu0 %v1089
          %1178 = vmatprep.subr.mxu0 %v1092
          %1179 = vmatpush1.msra.mxu0 %v1091
          %1180 = vmatprep.subr.mxu0 %v1094
          %1181 = vmatpush1.msra.mxu0 %v1093
          %1182 = vmatprep.subr.mxu0 %v1096
          %1183 = vmatpush1.msra.mxu0 %v1095
          %1184 = vmatprep.subr.mxu0 %v1098
          %1185 = vmatpush1.msra.mxu0 %v1097
          %1186 = vmatprep.subr.mxu0 %v1100
          %1187 = vmatpush1.msra.mxu0 %v1099
          %1188 = vmatprep.subr.mxu0 %v1102
          %1189 = vmatpush1.msra.mxu0 %v1101
          %1190 = vmatprep.subr.mxu0 %v1104
          %1191 = vmatpush1.msra.mxu0 %v1103
          %1192 = vmatprep.subr.mxu0 %v1106
          %1193 = vmatpush1.msra.mxu0 %v1105
          %1194 = vmatprep.subr.mxu0 %v1108
          %1195 = vmatpush1.msra.mxu0 %v1107
          %1196 = vmatprep.subr.mxu0 %v1110
          %1197 = vmatpush1.msra.mxu0 %v1109
          %1198 = vmatprep.subr.mxu0 %v1112
          %1199 = vmatpush1.msra.mxu0 %v1111
          %1200 = vmatprep.subr.mxu0 %v1114
          %1201 = vmatpush1.msra.mxu0 %v1113
          %1202 = vmatprep.subr.mxu0 %v1116
          %1203 = vmatpush1.msra.mxu0 %v1115
          %1204 = vmatprep.subr.mxu0 %v1118
          %1205 = vmatpush1.msra.mxu0 %v1117
          %1206 = vmatprep.subr.mxu0 %v1120
          %1207 = vmatpush1.msra.mxu0 %v1119
          %1208 = vmatprep.subr.mxu0 %v1122
          %1209 = vmatpush1.msra.mxu0 %v1121
          %1210 = vmatprep.subr.mxu0 %v1124
          %1211 = vmatpush1.msra.mxu0 %v1123
          %1212 = vmatprep.subr.mxu0 %v1126
          %1213 = vmatpush1.msra.mxu0 %v1125
          %1214 = vmatprep.subr.mxu0 %v1128
          %1215 = vmatpush1.msra.mxu0 %v1127
          %1216 = vmatprep.subr.mxu0 %v1130
          %1217 = vmatpush1.msra.mxu0 %v1129
          %1218 = vmatprep.subr.mxu0 %v1132
          %1219 = vmatpush1.msra.mxu0 %v1131
          %1220 = vmatprep.subr.mxu0 %v1134
          %1221 = vmatpush1.msra.mxu0 %v1133
          %1222 = vmatprep.subr.mxu0 %v1136
          %1223 = vmatpush1.msra.mxu0 %v1135
          %1224 = vmatprep.subr.mxu0 %v1138
          %1225 = vmatpush1.msra.mxu0 %v1137
          %1226 = vmatprep.subr.mxu0 %v1140
          %1227 = vmatpush1.msra.mxu0 %v1139
          %1228 = vmatprep.subr.mxu0 %v1142
          %1229 = vmatpush1.msra.mxu0 %v1141
          %1230 = vmatprep.subr.mxu0 %v1144
          %1231 = vmatpush1.msra.mxu0 %v1143
          %1232 = vmatprep.mubr.f32.mxu0 %v1154
          %1233 = vmatmul.mubr.f32.gmra.mrb[0].mxu0 %v1150
          %v1234 = vpop.f32.mrb[0].mxu0
          %v1235 = vadd.f32 %v1161, %v1234
          %v1236 = vpop.f32.mrb[0].mxu0
          %v1237 = vadd.f32 %v1165, %v1236
          %1238 = vdwg.mxu0
          %v1239 = vmax.f32 %v1235, 0.0
          %v1240 = vmax.f32 %v1237, 0.0
          %v1241 = vld [vmem:[%s470] sm:$0xff]
          %v1242 = vld [vmem:[%s470 + $0x8] sm:$0xff]
          %v1243 = vld [vmem:[%s470 + $0x10] sm:$0xff]
          %v1244 = vld [vmem:[%s470 + $0x18] sm:$0xff]
          %v1245 = vld [vmem:[%s470 + $0x20] sm:$0xff]
          %v1246 = vld [vmem:[%s470 + $0x28] sm:$0xff]
          %v1247 = vld [vmem:[%s470 + $0x30] sm:$0xff]
          %v1248 = vld [vmem:[%s470 + $0x38] sm:$0xff]
          %v1249 = vld [vmem:[%s470 + $0x40] sm:$0xff]
          %v1250 = vld [vmem:[%s470 + $0x48] sm:$0xff]
          %v1251 = vld [vmem:[%s470 + $0x50] sm:$0xff]
          %v1252 = vld [vmem:[%s470 + $0x58] sm:$0xff]
          %v1253 = vld [vmem:[%s470 + $0x60] sm:$0xff]
          %v1254 = vld [vmem:[%s470 + $0x68] sm:$0xff]
          %v1255 = vld [vmem:[%s470 + $0x70] sm:$0xff]
          %v1256 = vld [vmem:[%s470 + $0x78] sm:$0xff]
          %v1257 = vld [vmem:[%s470 + $0x80] sm:$0xff]
          %v1258 = vld [vmem:[%s470 + $0x88] sm:$0xff]
          %v1259 = vld [vmem:[%s470 + $0x90] sm:$0xff]
          %v1260 = vld [vmem:[%s470 + $0x98] sm:$0xff]
          %v1261 = vld [vmem:[%s470 + $0xa0] sm:$0xff]
          %v1262 = vld [vmem:[%s470 + $0xa8] sm:$0xff]
          %v1263 = vld [vmem:[%s470 + $0xb0] sm:$0xff]
          %v1264 = vld [vmem:[%s470 + $0xb8] sm:$0xff]
          %v1265 = vld [vmem:[%s470 + $0xc0] sm:$0xff]
          %v1266 = vld [vmem:[%s470 + $0xc8] sm:$0xff]
          %v1267 = vld [vmem:[%s470 + $0xd0] sm:$0xff]
          %v1268 = vld [vmem:[%s470 + $0xd8] sm:$0xff]
          %v1269 = vld [vmem:[%s470 + $0xe0] sm:$0xff]
          %v1270 = vld [vmem:[%s470 + $0xe8] sm:$0xff]
          %v1271 = vld [vmem:[%s470 + $0xf0] sm:$0xff]
          %v1272 = vld [vmem:[%s470 + $0xf8] sm:$0xff]
          %v1273 = vld [vmem:[%s473] sm:$0x1]
          %1274 = vmatprep.subr.mxu0 0.0
          %1275 = vmatpush1.msra.mxu0 %v1241
          %1276 = vmatprep.subr.mxu0 0.0
          %1277 = vmatpush1.msra.mxu0 %v1242
          %1278 = vmatprep.subr.mxu0 0.0
          %1279 = vmatpush1.msra.mxu0 %v1243
          %1280 = vmatprep.subr.mxu0 0.0
          %1281 = vmatpush1.msra.mxu0 %v1244
          %1282 = vmatprep.subr.mxu0 0.0
          %1283 = vmatpush1.msra.mxu0 %v1245
          %1284 = vmatprep.subr.mxu0 0.0
          %1285 = vmatpush1.msra.mxu0 %v1246
          %1286 = vmatprep.subr.mxu0 0.0
          %1287 = vmatpush1.msra.mxu0 %v1247
          %1288 = vmatprep.subr.mxu0 0.0
          %1289 = vmatpush1.msra.mxu0 %v1248
          %1290 = vmatprep.subr.mxu0 0.0
          %1291 = vmatpush1.msra.mxu0 %v1249
          %1292 = vmatprep.subr.mxu0 0.0
          %1293 = vmatpush1.msra.mxu0 %v1250
          %1294 = vmatprep.subr.mxu0 0.0
          %1295 = vmatpush1.msra.mxu0 %v1251
          %1296 = vmatprep.subr.mxu0 0.0
          %1297 = vmatpush1.msra.mxu0 %v1252
          %1298 = vmatprep.subr.mxu0 0.0
          %1299 = vmatpush1.msra.mxu0 %v1253
          %1300 = vmatprep.subr.mxu0 0.0
          %1301 = vmatpush1.msra.mxu0 %v1254
          %1302 = vmatprep.subr.mxu0 0.0
          %1303 = vmatpush1.msra.mxu0 %v1255
          %1304 = vmatprep.subr.mxu0 0.0
          %1305 = vmatpush1.msra.mxu0 %v1256
          %1306 = vmatprep.subr.mxu0 0.0
          %1307 = vmatpush1.msra.mxu0 %v1257
          %1308 = vmatprep.subr.mxu0 0.0
          %1309 = vmatpush1.msra.mxu0 %v1258
          %1310 = vmatprep.subr.mxu0 0.0
          %1311 = vmatpush1.msra.mxu0 %v1259
          %1312 = vmatprep.subr.mxu0 0.0
          %1313 = vmatpush1.msra.mxu0 %v1260
          %1314 = vmatprep.subr.mxu0 0.0
          %1315 = vmatpush1.msra.mxu0 %v1261
          %1316 = vmatprep.subr.mxu0 0.0
          %1317 = vmatpush1.msra.mxu0 %v1262
          %1318 = vmatprep.subr.mxu0 0.0
          %1319 = vmatpush1.msra.mxu0 %v1263
          %1320 = vmatprep.subr.mxu0 0.0
          %1321 = vmatpush1.msra.mxu0 %v1264
          %1322 = vmatprep.subr.mxu0 0.0
          %1323 = vmatpush1.msra.mxu0 %v1265
          %1324 = vmatprep.subr.mxu0 0.0
          %1325 = vmatpush1.msra.mxu0 %v1266
          %1326 = vmatprep.subr.mxu0 0.0
          %1327 = vmatpush1.msra.mxu0 %v1267
          %1328 = vmatprep.subr.mxu0 0.0
          %1329 = vmatpush1.msra.mxu0 %v1268
          %1330 = vmatprep.subr.mxu0 0.0
          %1331 = vmatpush1.msra.mxu0 %v1269
          %1332 = vmatprep.subr.mxu0 0.0
          %1333 = vmatpush1.msra.mxu0 %v1270
          %1334 = vmatprep.subr.mxu0 0.0
          %1335 = vmatpush1.msra.mxu0 %v1271
          %1336 = vmatprep.subr.mxu0 0.0
          %1337 = vmatpush1.msra.mxu0 %v1272
          %1338 = vmatprep.mubr.f32.mxu0 %v1240
          %1339 = vmatmul.mubr.f32.gmra.mrb[0].mxu0 %v1239
          %v1340 = vpop.f32.mrb[0].mxu0
          %v1341 = vadd.f32 %v1273, %v1340
          %v1342 = vpop.f32.mrb[0].mxu0
          %1343 = vdwg.mxu0
          %1345 = vrot.lane.b32.xlu0 %v1341, 124
          %v1346 = vpop.permute.xlu0 %1345
          %v1348 = vmax.f32 %v1341, %v1346
          %v1349 = vsub.f32 %v1341, %v1348
          %v1350 = vmul.f32 %v1349, 1.442695
          %v1351 = vpow.pop %v1350
          %1353 = vrot.lane.b32.xlu0 %v1348, 4
          %v1354 = vpop.permute.xlu0 %1353
          %v1356 = vsub.f32 %v1341, %v1354
          %v1357 = vmul.f32 %v1356, 1.442695
          %v1358 = vpow.pop %v1357
          %1360 = vrot.lane.b32.xlu0 %v1358, 124
          %v1361 = vpop.permute.xlu0 %1360
          %v1363 = vadd.f32 %v1351, %v1361
          %v1364 = vlog2.pop %v1363
          %v1365 = vmul.f32 %v1364, 0.6931472
          %v1366 = vadd.f32 %v1348, %v1365
          %v1367 = vsub.f32 %v1341, %v1366
          %1369 = vrot.lane.b32.xlu0 %v1366, 4
          %v1370 = vpop.permute.xlu0 %1369
          %v1372 = vsub.f32 %v1341, %v1370
          %vm1373 = vcmask 31744
          %v1374 = vsel %vm1373, %v1367, %v1372
          %v1375 = vlaneseq
          %v1376 = vshrl.u32 %v1375, 7
          %v1377 = vstv %s33
          %vm1378 = vcmp.eq.s32.totalorder %v1376, %v1377
          %v1379 = vld [vmem:[%s443] sm:$0x3]
          %v1380 = vsel %vm1378, 1, 0
          %vm1381 = vcmp.eq.s32.totalorder %v1380, 1
          %v1382 = vlaneseq
          %v1383 = vshrl.u32 %v1382, 7
          %v1384 = vsub.s32 0, %v1383
          %v1385 = vrot.slane %v1374, %v1384
          %v1386 = vsel %vm1381, %v1385, %v1379
          %vm1387 = vcmask 58368
          %1388 = vst.msk [vmem:[%s443] sm:$0x3] %vm1387, %v1386
        $region64: #{tpu_custom_call.1} parent=47 // pred_fallthru
          _
        %s1389 = sand.u32 %s240, 1
        %s1390 = scalar_lea.sflag [#allocation5], %s1389
        %s1391 = sand.u32 %s240, 1
        %s1392 = smul.addr %s1391, 2
        %s1393 = scalar_lea.vmem [#allocation8], %s1392
        // Predicated region
        $region65: #{tpu_custom_call.1} parent=47 // pred_check
          %p1394 = pneg %p250
        $region66: #{tpu_custom_call.1} parent=47 // pred_check_branch
          %1396 = sbr.rel (%p1394) target = $region68
        $region67: #{tpu_custom_call.1} parent=47 // pred_region
          %s1398 = ssub.s32 32, 32
          %1399 = vsyncadd %s1390, %s1398
          %s1400 = smul.addr %s32, 32
          %s1401 = scalar_lea.hbm %s7, %s1400
          %s1403 = sshll.u32 %s1393, 4
          %s1404 = int_to_ptr.vmem [resolvable:$true] %s1403
          %1406 = dma.vmem_to_hbm [thread:$0]  %s1404, 32, %s1401, %s1390
        $region68: #{tpu_custom_call.1} parent=47 // pred_fallthru
          _
      $region48: #{tpu_custom_call.1} parent=5 // pred_fallthru
        _
      %p1407 = scmp.le.s32.totalorder 2, %s22
      // Predicated region
      $region69: #{tpu_custom_call.1} parent=5 // pred_check
        %p1408 = pneg %p1407
      $region70: #{tpu_custom_call.1} parent=5 // pred_check_branch
        %1410 = sbr.rel (%p1408) target = $region72
      $region71: #{tpu_custom_call.1} parent=5 // pred_region
        %s1411 = ssub.s32 %s22, 2
        // Predicated region
        $region73: #{tpu_custom_call.1} parent=71 // pred_check
          %p1412 = pneg %p256
        $region74: #{tpu_custom_call.1} parent=71 // pred_check_branch
          %1414 = sbr.rel (%p1412) target = $region76
        $region75: #{tpu_custom_call.1} parent=71 // pred_region
          %s1415 = sand.u32 %s241, 1
          %s1416 = scalar_lea.sflag [#allocation5], %s1415
          %s1417 = sand.u32 %s241, 1
          %s1418 = smul.addr %s1417, 2
          %s1419 = scalar_lea.vmem [#allocation8], %s1418
          %1420 = dma.done %s1416, 32
        $region76: #{tpu_custom_call.1} parent=71 // pred_fallthru
          _
      $region72: #{tpu_custom_call.1} parent=5 // pred_fallthru
        _
    $region6: #{tpu_custom_call.1} parent=1 // loop_footer
      %s26 = sadd.s32 1, %s22
    $region7: #{tpu_custom_call.1} parent=1 // loop_footer_branch
      %21 = sbr.rel target = $region3
    $region8: #{tpu_custom_call.1} parent=1 // loop_exit
      _
    %1421 = vsyncpa [#allocation4], 1
    %s1422 = scalar_lea.sflag [#allocation4], 1
    %1423 = vsyncpa %s1422, 1
    %1424 = vsyncpa [#allocation7], 1
    %s1425 = scalar_lea.sflag [#allocation7], 1
    %1426 = vsyncpa %s1425, 1
    %1427 = vsyncpa [#allocation5], 1
    %s1428 = scalar_lea.sflag [#allocation5], 1
    %1429 = vsyncpa %s1428, 1

</llo_original>
